<compile_context>
chip_gen: v5e
topology: v5e:2x2
jax: 0.10.0
libtpu: 0.0.40
codegen_flags: <defaults>
</compile_context>

<pallas_src>
import math
import numpy as np
import jax
import jax.numpy as jnp
from jax import lax
from jax.experimental import pallas as pl
from jax.experimental.pallas import tpu as pltpu


def _round_up(v, m):
    return ((v + m - 1) // m) * m


def _make_spectrogram_kernel(tm, hop, f_pad, freq, power):
    def kernel(a_ref, nx_ref, bt_ref, bb_ref, o_ref):
        # a_ref:  (1, hop, TM)   column i = chunk (t*TM + i) = first half of frame i
        # nx_ref: (1, hop, 128)  column 0 = first chunk of the next tile
        # bt_ref: (2*Fp, hop)    windowed DFT basis rows [cos | -sin], samples 0..hop-1
        # bb_ref: (2*Fp, hop)    windowed DFT basis rows [cos | -sin], samples hop..n_fft-1
        # o_ref:  (1, freq, TM)  power spectrogram tile, already in (freq, time) layout
        a = a_ref[0]                                                # (hop, TM)

        # Second half of frame i is chunk i+1: a 1-lane rotation of `a`
        # (cheap XLU vrot), with the wrapped last column replaced by the first
        # chunk of the next tile.
        a_nxt = pltpu.roll(a, shift=tm - 1, axis=1)                 # col i -> a[:, (i+1) % TM]
        lane = lax.broadcasted_iota(jnp.int32, (hop, tm), 1)
        a_nxt = jnp.where(lane == tm - 1, nx_ref[0][:, 0:1], a_nxt)

        # Two K=hop lane-dense MXU matmuls (same total K work as one K=n_fft
        # matmul) -> no (TM, n_fft) scratch assembly, no in-kernel transpose.
        acc = jnp.dot(bt_ref[...], a,
                      preferred_element_type=jnp.float32,
                      precision=lax.Precision.HIGHEST)
        acc = acc + jnp.dot(bb_ref[...], a_nxt,
                            preferred_element_type=jnp.float32,
                            precision=lax.Precision.HIGHEST)        # (2*Fp, TM)

        re = acc[:f_pad, :]
        im = acc[f_pad:, :]
        pw = re * re + im * im                                      # |X|^2
        if power == 1.0:
            pw = jnp.sqrt(pw)
        elif power != 2.0:
            pw = pw ** (0.5 * power)
        o_ref[0] = pw[:freq, :]                                     # native (freq, time)
    return kernel


def spectrogram_pallas(waveform, n_fft=400, win_length=None, hop_length=None,
                       pad=0, power=2.0, normalized=False, center=True,
                       pad_mode="reflect", onesided=True):
    """waveform (..., T) float32 -> (..., n_fft//2+1, n_frames) spectrogram."""
    if win_length is None:
        win_length = n_fft
    if hop_length is None:
        hop_length = win_length // 2
    hop = hop_length

    assert onesided, "only onesided=True supported"
    assert win_length <= n_fft
    assert n_fft == 2 * hop, "kernel requires hop_length == n_fft // 2 (module default)"
    assert power is not None, "power=None (complex spectrum) not supported"
    # TODO(synk): power=None (complex output) and hop_length != n_fft//2 have no Pallas path here.

    waveform = jnp.asarray(waveform, jnp.float32)
    lead = waveform.shape[:-1]
    T = waveform.shape[-1]
    x = waveform.reshape((-1, T))
    B = x.shape[0]

    freq = n_fft // 2 + 1
    f_pad = _round_up(freq, 128)          # lane-pad freq -> clean re/im row groups

    # optional two-sided constant pad, then center padding (reflect by default)
    if pad > 0:
        x = jnp.pad(x, ((0, 0), (pad, pad)))
    if center:
        half = n_fft // 2
        if pad_mode == "reflect":
            xp = jnp.pad(x, ((0, 0), (half, half)), mode="reflect")
        else:
            xp = jnp.pad(x, ((0, 0), (half, half)))
    else:
        xp = x
    Tp = xp.shape[-1]
    n_frames = 1 + (Tp - n_fft) // hop

    # Frame-column tile = output time (lane) width. Big tiles amortize per-step
    # overhead and fill the MXU; short signals keep the minimal 128-wide tile.
    tm = min(512, _round_up(n_frames, 128))
    n_tiles = pl.cdiv(n_frames, tm)
    frames_padded = n_tiles * tm

    # Non-overlapping hop-sized chunks, transposed so frame index is the lane
    # axis: chunks_t[b, n, i] = sample i*hop + n.  Frame i = [chunk i ; chunk i+1].
    # Invariant: n_chunks_pad >= n_tiles*tm + 128 so the last tile's next-chunk
    # block DMA stays in bounds (TPU has no runtime OOB check). The trailing
    # zero padding only feeds frames >= n_frames, which are sliced off below.
    n_chunks_pad = n_tiles * tm + 128
    xp = jnp.pad(xp, ((0, 0), (0, n_chunks_pad * hop - Tp)))
    chunks_t = xp.reshape(B, n_chunks_pad, hop).transpose(0, 2, 1)  # (B, hop, n_chunks)

    # Deterministic constants (host/numpy): periodic Hann (centered if
    # win_length < n_fft) folded into the transposed onesided DFT basis,
    # freq-padded to a sublane-friendly 128-multiple and split at sample hop.
    n = np.arange(win_length, dtype=np.float64)
    hann = 0.5 * (1.0 - np.cos(2.0 * math.pi * n / win_length))
    win = np.zeros(n_fft, dtype=np.float64)
    off = (n_fft - win_length) // 2
    win[off:off + win_length] = hann
    if normalized:
        win = win / math.sqrt(float(np.sum(hann * hann)))
    k = np.arange(f_pad, dtype=np.float64)[:, None]                 # (f_pad, 1)
    nn = np.arange(n_fft, dtype=np.float64)[None, :]                # (1, n_fft)
    ang = 2.0 * math.pi * k * nn / n_fft
    mask = (k < freq).astype(np.float64)
    cos_w = np.cos(ang) * mask * win[None, :]
    sin_w = -np.sin(ang) * mask * win[None, :]
    basis_t = np.concatenate([cos_w, sin_w], axis=0)                # (2*f_pad, n_fft)
    bt = jnp.asarray(basis_t[:, :hop], jnp.float32)                 # samples [0, hop)
    bb = jnp.asarray(basis_t[:, hop:], jnp.float32)                 # samples [hop, n_fft)

    kernel = _make_spectrogram_kernel(tm, hop, f_pad, freq, float(power))

    out = pl.pallas_call(
        kernel,
        out_shape=jax.ShapeDtypeStruct((B, freq, frames_padded), jnp.float32),
        grid=(B, n_tiles),
        in_specs=[
            pl.BlockSpec((1, hop, tm), lambda b, t: (b, 0, t)),
            pl.BlockSpec((1, hop, 128),
                         lambda b, t: (b, 0, (t + 1) * (tm // 128))),
            pl.BlockSpec((2 * f_pad, hop), lambda b, t: (0, 0)),    # stays VMEM-resident
            pl.BlockSpec((2 * f_pad, hop), lambda b, t: (0, 0)),    # stays VMEM-resident
        ],
        out_specs=pl.BlockSpec((1, freq, tm), lambda b, t: (b, 0, t)),
        compiler_params=pltpu.CompilerParams(
            dimension_semantics=("parallel", "parallel")),
    )(chunks_t, chunks_t, bt, bb)

    if frames_padded != n_frames:
        out = out[:, :, :n_frames]
    return out.reshape(lead + (freq, n_frames))


if __name__ == "__main__":
    key = jax.random.PRNGKey(0)
    B, T = 2, 512
    n_fft, hop = 128, 64
    waveform = jax.random.normal(key, (B, T), dtype=jnp.float32)

    spec = spectrogram_pallas(waveform, n_fft=n_fft, hop_length=hop)
    spec = jax.block_until_ready(spec)

    # FFT-based reference with identical semantics (center=True, reflect pad,
    # periodic Hann, onesided, power=2).
    padw = n_fft // 2
    padded = jnp.pad(waveform, ((0, 0), (padw, padw)), mode="reflect")
    n_frames = 1 + (T + 2 * padw - n_fft) // hop
    idx = (jnp.arange(n_frames)[:, None] * hop) + jnp.arange(n_fft)[None, :]
    frames = padded[:, idx]
    n = np.arange(n_fft, dtype=np.float64)
    hann = jnp.asarray(0.5 * (1.0 - np.cos(2.0 * math.pi * n / n_fft)), jnp.float32)
    ref = jnp.abs(jnp.fft.rfft(frames * hann[None, None, :], axis=-1)) ** 2
    ref = jnp.transpose(ref, (0, 2, 1))

    assert spec.shape == (B, n_fft // 2 + 1, n_frames), spec.shape
    np.testing.assert_allclose(np.asarray(spec), np.asarray(ref), rtol=2e-3, atol=2e-3)

    print("KERNEL_OK")
</pallas_src>

<mosaic_0001>
module attributes {stable_mosaic.version = 11 : i64} {
  func.func @kernel(%arg0: i32, %arg1: i32, %arg2: memref<1x64x128xf32, #tpu.memory_space<vmem>>, %arg3: memref<1x64x128xf32, #tpu.memory_space<vmem>>, %arg4: memref<256x64xf32, #tpu.memory_space<vmem>>, %arg5: memref<256x64xf32, #tpu.memory_space<vmem>>, %arg6: memref<1x65x128xf32, #tpu.memory_space<vmem>>) attributes {dimension_semantics = [#tpu.dimension_semantics<parallel>, #tpu.dimension_semantics<parallel>], iteration_bounds = array<i64: 2, 1>, scalar_prefetch = 0 : i64, scratch_operands = 0 : i64, tpu.core_type = #tpu.core_type<tc>, window_params = [{transform_indices = @transform_0, window_bounds = array<i64: 1, 64, 128>}, {transform_indices = @transform_1, window_bounds = array<i64: 1, 64, 128>}, {pipeline_mode = #tpu.pipeline_mode<synchronous>, transform_indices = @transform_2, window_bounds = array<i64: 256, 64>}, {pipeline_mode = #tpu.pipeline_mode<synchronous>, transform_indices = @transform_3, window_bounds = array<i64: 256, 64>}, {transform_indices = @transform_4, window_bounds = array<i64: 1, 65, 128>}]} {
    %c0 = arith.constant 0 : index
    %c0_0 = arith.constant 0 : index
    %c0_1 = arith.constant 0 : index
    %0 = vector.load %arg2[%c0, %c0_0, %c0_1] : memref<1x64x128xf32, #tpu.memory_space<vmem>>, vector<1x64x128xf32>
    %1 = vector.shape_cast %0 : vector<1x64x128xf32> to vector<64x128xf32>
    %c127_i32 = arith.constant 127 : i32
    %2 = tpu.dynamic_rotate %1 by %c127_i32 dim 1 : vector<64x128xf32>, i32 -> vector<64x128xf32>
    %3 = tpu.iota {dimensions = array<i32: 1>} : vector<64x128xi32>
    %c127_i32_2 = arith.constant 127 : i32
    %4 = vector.broadcast %c127_i32_2 : i32 to vector<64x128xi32>
    %5 = arith.cmpi eq, %3, %4 : vector<64x128xi32>
    %c0_3 = arith.constant 0 : index
    %c0_4 = arith.constant 0 : index
    %c0_5 = arith.constant 0 : index
    %6 = vector.load %arg3[%c0_3, %c0_4, %c0_5] : memref<1x64x128xf32, #tpu.memory_space<vmem>>, vector<1x64x128xf32>
    %7 = vector.shape_cast %6 : vector<1x64x128xf32> to vector<64x128xf32>
    %8 = vector.extract_strided_slice %7 {offsets = [0, 0], sizes = [64, 1], strides = [1, 1]} : vector<64x128xf32> to vector<64x1xf32>
    %9 = vector.shape_cast %8 : vector<64x1xf32> to vector<64x1xf32>
    %10 = vector.broadcast %9 : vector<64x1xf32> to vector<64x128xf32>
    %11 = arith.select %5, %10, %2 : vector<64x128xi1>, vector<64x128xf32>
    %c0_6 = arith.constant 0 : index
    %c0_7 = arith.constant 0 : index
    %12 = vector.load %arg4[%c0_6, %c0_7] : memref<256x64xf32, #tpu.memory_space<vmem>>, vector<256x64xf32>
    %cst = arith.constant dense<0.000000e+00> : vector<256x128xf32>
    %13 = tpu.matmul %12, %1, %cst {dimension_numbers = #tpu.dot_dimension_numbers<[1], [0], [0], [1], [0, 0, 1, 1], [], []>, precision = #tpu.contract_precision<fp32>} : vector<256x64xf32>, vector<64x128xf32>, vector<256x128xf32> -> vector<256x128xf32>
    %c0_8 = arith.constant 0 : index
    %c0_9 = arith.constant 0 : index
    %14 = vector.load %arg5[%c0_8, %c0_9] : memref<256x64xf32, #tpu.memory_space<vmem>>, vector<256x64xf32>
    %cst_10 = arith.constant dense<0.000000e+00> : vector<256x128xf32>
    %15 = tpu.matmul %14, %11, %cst_10 {dimension_numbers = #tpu.dot_dimension_numbers<[1], [0], [0], [1], [0, 0, 1, 1], [], []>, precision = #tpu.contract_precision<fp32>} : vector<256x64xf32>, vector<64x128xf32>, vector<256x128xf32> -> vector<256x128xf32>
    %16 = arith.addf %13, %15 : vector<256x128xf32>
    %17 = vector.extract_strided_slice %16 {offsets = [0, 0], sizes = [128, 128], strides = [1, 1]} : vector<256x128xf32> to vector<128x128xf32>
    %18 = vector.extract_strided_slice %16 {offsets = [128, 0], sizes = [128, 128], strides = [1, 1]} : vector<256x128xf32> to vector<128x128xf32>
    %19 = arith.mulf %17, %17 : vector<128x128xf32>
    %20 = arith.mulf %18, %18 : vector<128x128xf32>
    %21 = arith.addf %19, %20 : vector<128x128xf32>
    %22 = vector.extract_strided_slice %21 {offsets = [0, 0], sizes = [65, 128], strides = [1, 1]} : vector<128x128xf32> to vector<65x128xf32>
    %c0_11 = arith.constant 0 : index
    %c0_12 = arith.constant 0 : index
    %c0_13 = arith.constant 0 : index
    %23 = vector.load %arg6[%c0_11, %c0_12, %c0_13] : memref<1x65x128xf32, #tpu.memory_space<vmem>>, vector<1x65x128xf32>
    %24 = vector.shape_cast %23 : vector<1x65x128xf32> to vector<65x128xf32>
    %25 = vector.shape_cast %22 : vector<65x128xf32> to vector<1x65x128xf32>
    tpu.vector_store %arg6[%c0_11, %c0_12, %c0_13], %25 {strides = array<i32>} : memref<1x65x128xf32, #tpu.memory_space<vmem>>, vector<1x65x128xf32>,
    return
  }
  func.func @transform_0(%arg0: i32, %arg1: i32) -> (i32, i32, i32) {
    %c0_i32 = arith.constant 0 : i32
    %c0_i32_0 = arith.constant 0 : i32
    return %arg0, %c0_i32, %arg1 : i32, i32, i32
  }
  func.func @transform_1(%arg0: i32, %arg1: i32) -> (i32, i32, i32) {
    %c1_i32 = arith.constant 1 : i32
    %0 = arith.addi %arg1, %c1_i32 : i32
    %c1_i32_0 = arith.constant 1 : i32
    %1 = arith.muli %0, %c1_i32_0 : i32
    %c0_i32 = arith.constant 0 : i32
    %c0_i32_1 = arith.constant 0 : i32
    return %arg0, %c0_i32, %1 : i32, i32, i32
  }
  func.func @transform_2(%arg0: i32, %arg1: i32) -> (i32, i32) {
    %c0_i32 = arith.constant 0 : i32
    %c0_i32_0 = arith.constant 0 : i32
    %c0_i32_1 = arith.constant 0 : i32
    return %c0_i32, %c0_i32_0 : i32, i32
  }
  func.func @transform_3(%arg0: i32, %arg1: i32) -> (i32, i32) {
    %c0_i32 = arith.constant 0 : i32
    %c0_i32_0 = arith.constant 0 : i32
    %c0_i32_1 = arith.constant 0 : i32
    return %c0_i32, %c0_i32_0 : i32, i32
  }
  func.func @transform_4(%arg0: i32, %arg1: i32) -> (i32, i32, i32) {
    %c0_i32 = arith.constant 0 : i32
    %c0_i32_0 = arith.constant 0 : i32
    return %arg0, %c0_i32, %arg1 : i32, i32, i32
  }
}

</mosaic_0001>

<llo_original>
// kernel: tpu_custom_call.1
$region0: #{tpu_custom_call.1}
  #allocation0 [shape = 'u32[]', space=smem, size = 0x4, offset = 0x4, fixed_abs, tag = 'smem constant byte address 0x4 - core index']
  #allocation1 [shape = 'u32[72,128]{1,0:T(1,128)}', space=vmem, size = 0x9000, scoped, tag = 'internal scratch']
  %s0 = inlined_call_operand.vmem [shape: f32[2,64,256], index: 0, kind: input, shape index: {}]
  %s1 = inlined_call_operand.vmem [shape: f32[2,64,256], index: 1, kind: input, shape index: {}]
  %s2 = inlined_call_operand.vmem [shape: f32[256,64], index: 2, kind: input, shape index: {}]
  %s3 = inlined_call_operand.vmem [shape: f32[256,64], index: 3, kind: input, shape index: {}]
  %s4 = inlined_call_operand.vmem [shape: f32[2,65,128], index: 4, kind: output, shape index: {}]
  %s5 = sld [smem:[#allocation0]]
  $region125: #{tpu_custom_call.1} parent=0
    _
  %s7 = ssub.s32 1, %s5
  %s8 = scalar_select 0, %s7, %s5
  $region1: #{tpu_custom_call.1} parent=0
    #allocation2 [shape = 'u8[65536]{0}', space=vmem, size = 0x10000, scoped, tag = 'input window, operand 0']
    #allocation3 [shape = 'u8[65536]{0}', space=vmem, size = 0x10000, scoped, tag = 'input window, operand 1']
    loop: start=0, step=1, limit=4
    $region2: #{tpu_custom_call.1} parent=1 // loop_pre_header
      _
    $region3: #{tpu_custom_call.1} parent=1 // loop_header
      %s10 = sphi 0, %s14
      %p11 = scmp.ge.s32.totalorder %s10, 4
      %s17 = sphi 0, %s29
      %s18 = sphi 0, %s25
      %s19 = sphi 0, %s17
      %s20 = sphi 0, %s18
      %s21 = sphi 0, %s19
      %s22 = sphi 0, %s20
      %s34 = sphi 0, %s36
      %s37 = sphi 0, %s34
      %s38 = sphi 0, %s37
      %s54 = sphi 0, %s38
      %s64 = sphi 0, %s66
      %s67 = sphi 0, %s64
      %s68 = sphi 0, %s67
      %s84 = sphi 0, %s68
      %s88 = sphi 0, %s88
      %s90 = sphi 0, %s88
      %s91 = sphi 0, %s90
      %s105 = sphi 0, %s91
      %s109 = sphi 0, %s109
      %s111 = sphi 0, %s109
      %s112 = sphi 0, %s111
      %s126 = sphi 0, %s112
      %s134 = sphi 0, %s136
      %s137 = sphi 0, %s134
      %s138 = sphi 0, %s137
      %s154 = sphi 0, %s138
    $region4: #{tpu_custom_call.1} parent=1 // loop_header_branch
      %13 = sbr.rel (%p11) target = $region8
    $region5: #{tpu_custom_call.1} parent=1 // loop_body
      %s15 = ssub.s32 %s10, 1
      %s16 = ssub.s32 %s10, 2
      %s23 = sadd.s32 1, %s18
      %p24 = scmp.ge.s32.totalorder %s23, 1
      %s25 = scalar_select %p24, 0, %s23
      %s26 = sadd.s32 1, %s17
      %s27 = scalar_select %p24, %s26, %s17
      %p28 = scmp.ge.s32.totalorder %s27, 2
      %s29 = scalar_select %p28, 0, %s27
      %s30 = ssub.s32 %s17, %s29
      %s31 = ssub.s32 %s18, %s25
      %s32 = sor.u32 %s30, %s31
      %p33 = scmp.eq.s32.totalorder %s32, 0
      %s35 = sadd.s32 %s34, 1
      %s36 = scalar_select %p33, %s34, %s35
      %p39 = pneg %p33
      %p40 = scmp.eq.s32.totalorder %s10, 1
      %p41 = por %p39, %p40
      %p42 = scmp.ne.s32.totalorder %s34, %s37
      %p43 = scmp.eq.s32.totalorder %s10, 0
      %p44 = por %p42, %p43
      %p45 = scmp.ne.s32.totalorder %s34, %s37
      %p46 = scmp.eq.s32.totalorder %s15, 1
      %p47 = por %p45, %p46
      %p48 = scmp.ne.s32.totalorder %s37, %s38
      %p49 = scmp.eq.s32.totalorder %s15, 0
      %p50 = por %p48, %p49
      %p51 = scmp.ne.s32.totalorder %s37, %s38
      %p52 = scmp.eq.s32.totalorder %s16, 1
      %p53 = por %p51, %p52
      %p55 = scmp.ne.s32.totalorder %s38, %s54
      %p56 = scmp.eq.s32.totalorder %s16, 0
      %p57 = por %p55, %p56
      %s58 = sadd.s32 %s18, 1
      %s59 = sadd.s32 %s25, 1
      %s60 = ssub.s32 %s17, %s29
      %s61 = ssub.s32 %s58, %s59
      %s62 = sor.u32 %s60, %s61
      %p63 = scmp.eq.s32.totalorder %s62, 0
      %s65 = sadd.s32 %s64, 1
      %s66 = scalar_select %p63, %s64, %s65
      %p69 = pneg %p63
      %p70 = scmp.eq.s32.totalorder %s10, 1
      %p71 = por %p69, %p70
      %p72 = scmp.ne.s32.totalorder %s64, %s67
      %p73 = scmp.eq.s32.totalorder %s10, 0
      %p74 = por %p72, %p73
      %p75 = scmp.ne.s32.totalorder %s64, %s67
      %p76 = scmp.eq.s32.totalorder %s15, 1
      %p77 = por %p75, %p76
      %p78 = scmp.ne.s32.totalorder %s67, %s68
      %p79 = scmp.eq.s32.totalorder %s15, 0
      %p80 = por %p78, %p79
      %p81 = scmp.ne.s32.totalorder %s67, %s68
      %p82 = scmp.eq.s32.totalorder %s16, 1
      %p83 = por %p81, %p82
      %p85 = scmp.ne.s32.totalorder %s68, %s84
      %p86 = scmp.eq.s32.totalorder %s16, 0
      %p87 = por %p85, %p86
      %s89 = sadd.s32 %s88, 1
      %p92 = scmp.eq.s32.totalorder %s10, 1
      %p93 = scmp.ne.s32.totalorder %s88, %s90
      %p94 = scmp.eq.s32.totalorder %s10, 0
      %p95 = por %p93, %p94
      %p96 = scmp.ne.s32.totalorder %s88, %s90
      %p97 = scmp.eq.s32.totalorder %s15, 1
      %p98 = por %p96, %p97
      %p99 = scmp.ne.s32.totalorder %s90, %s91
      %p100 = scmp.eq.s32.totalorder %s15, 0
      %p101 = por %p99, %p100
      %p102 = scmp.ne.s32.totalorder %s90, %s91
      %p103 = scmp.eq.s32.totalorder %s16, 1
      %p104 = por %p102, %p103
      %p106 = scmp.ne.s32.totalorder %s91, %s105
      %p107 = scmp.eq.s32.totalorder %s16, 0
      %p108 = por %p106, %p107
      %s110 = sadd.s32 %s109, 1
      %p113 = scmp.eq.s32.totalorder %s10, 1
      %p114 = scmp.ne.s32.totalorder %s109, %s111
      %p115 = scmp.eq.s32.totalorder %s10, 0
      %p116 = por %p114, %p115
      %p117 = scmp.ne.s32.totalorder %s109, %s111
      %p118 = scmp.eq.s32.totalorder %s15, 1
      %p119 = por %p117, %p118
      %p120 = scmp.ne.s32.totalorder %s111, %s112
      %p121 = scmp.eq.s32.totalorder %s15, 0
      %p122 = por %p120, %p121
      %p123 = scmp.ne.s32.totalorder %s111, %s112
      %p124 = scmp.eq.s32.totalorder %s16, 1
      %p125 = por %p123, %p124
      %p127 = scmp.ne.s32.totalorder %s112, %s126
      %p128 = scmp.eq.s32.totalorder %s16, 0
      %p129 = por %p127, %p128
      %s130 = ssub.s32 %s17, %s29
      %s131 = ssub.s32 %s18, %s25
      %s132 = sor.u32 %s130, %s131
      %p133 = scmp.eq.s32.totalorder %s132, 0
      %s135 = sadd.s32 %s134, 1
      %s136 = scalar_select %p133, %s134, %s135
      %p139 = pneg %p133
      %p140 = scmp.eq.s32.totalorder %s10, 1
      %p141 = por %p139, %p140
      %p142 = scmp.ne.s32.totalorder %s134, %s137
      %p143 = scmp.eq.s32.totalorder %s10, 0
      %p144 = por %p142, %p143
      %p145 = scmp.ne.s32.totalorder %s134, %s137
      %p146 = scmp.eq.s32.totalorder %s15, 1
      %p147 = por %p145, %p146
      %p148 = scmp.ne.s32.totalorder %s137, %s138
      %p149 = scmp.eq.s32.totalorder %s15, 0
      %p150 = por %p148, %p149
      %p151 = scmp.ne.s32.totalorder %s137, %s138
      %p152 = scmp.eq.s32.totalorder %s16, 1
      %p153 = por %p151, %p152
      %p155 = scmp.ne.s32.totalorder %s138, %s154
      %p156 = scmp.eq.s32.totalorder %s16, 0
      %p157 = por %p155, %p156
      %p158 = scmp.le.s32.totalorder 1, %s10
      %p159 = scmp.lt.s32.totalorder %s10, 3
      %p160 = pnand %p158, %p159
      %p161 = pneg %p160
      // Predicated region
      $region9: #{tpu_custom_call.1} parent=5 // pred_check
        _
      $region10: #{tpu_custom_call.1} parent=5 // pred_check_branch
        %163 = sbr.rel (%p160) target = $region12
      $region11: #{tpu_custom_call.1} parent=5 // pred_region
        %s164 = ssub.s32 %s10, 1
        // Predicated region
        $region13: #{tpu_custom_call.1} parent=11 // pred_check
          %p165 = pneg %p101
        $region14: #{tpu_custom_call.1} parent=11 // pred_check_branch
          %167 = sbr.rel (%p165) target = $region16
        $region15: #{tpu_custom_call.1} parent=11 // pred_region
          _
        $region16: #{tpu_custom_call.1} parent=11 // pred_fallthru
          _
        // Predicated region
        $region17: #{tpu_custom_call.1} parent=11 // pred_check
          %p168 = pneg %p122
        $region18: #{tpu_custom_call.1} parent=11 // pred_check_branch
          %170 = sbr.rel (%p168) target = $region20
        $region19: #{tpu_custom_call.1} parent=11 // pred_region
          _
        $region20: #{tpu_custom_call.1} parent=11 // pred_fallthru
          _
      $region12: #{tpu_custom_call.1} parent=5 // pred_fallthru
        _
      %p171 = scmp.lt.s32.totalorder %s10, 2
      // Predicated region
      $region21: #{tpu_custom_call.1} parent=5 // pred_check
        %p172 = pneg %p171
      $region22: #{tpu_custom_call.1} parent=5 // pred_check_branch
        %174 = sbr.rel (%p172) target = $region24
      $region23: #{tpu_custom_call.1} parent=5 // pred_region
        // Predicated region
        $region25: #{tpu_custom_call.1} parent=23 // pred_check
          %p175 = pneg %p44
        $region26: #{tpu_custom_call.1} parent=23 // pred_check_branch
          %177 = sbr.rel (%p175) target = $region28
        $region27: #{tpu_custom_call.1} parent=23 // pred_region
          %s178 = sand.u32 %s34, 1
          %s179 = sand.u32 %s34, 1
          %s180 = smul.addr %s179, 64
          %s181 = scalar_lea.vmem [#allocation2], %s180
          %s182 = smul.addr %s17, 16
          %s183 = sadd.s32 %s18, %s182
          %s184 = smul.addr %s183, 8
          %s185 = scalar_lea.vmem %s0, %s184
          // Predicated region
          $region29: #{tpu_custom_call.1} parent=27 // pred_check
            _
          $region30: #{tpu_custom_call.1} parent=27 // pred_check_branch
            %187 = sbr.rel (0) target = $region32
          $region31: #{tpu_custom_call.1} parent=27 // pred_region
            // Predicated region
            $region33: #{tpu_custom_call.1} parent=31 // pred_check
              _
            $region34: #{tpu_custom_call.1} parent=31 // pred_check_branch
              %189 = sbr.rel (0) target = $region36
            $region35: #{tpu_custom_call.1} parent=31 // pred_region
              // Predicated region
              $region48: #{tpu_custom_call.1} parent=35 // pred_check
                _
              $region49: #{tpu_custom_call.1} parent=35 // pred_check_branch
                %219 = sbr.rel (0) target = $region51
              $region50: #{tpu_custom_call.1} parent=35 // pred_region
                loop: start=0, step=1, limit=1
                $region52: #{tpu_custom_call.1} parent=50 // loop_pre_header
                  _
                $region53: #{tpu_custom_call.1} parent=50 // loop_header
                  %s221 = sphi 0, %s225
                  %p222 = scmp.ge.s32.totalorder %s221, 1
                  %s226 = sphi %s185, %s185
                  %s227 = sphi %s181, %s181
                $region54: #{tpu_custom_call.1} parent=50 // loop_header_branch
                  %224 = sbr.rel (%p222) target = $region58
                $region55: #{tpu_custom_call.1} parent=50 // loop_body
                  %v228 = vld [vmem:[%s226] sm:$0xff]
                  %229 = vst [vmem:[%s227] sm:$0xff] %v228
                  %v230 = vld [vmem:[%s226 + $0x10] sm:$0xff]
                  %231 = vst [vmem:[%s227 + $0x8] sm:$0xff] %v230
                  %v232 = vld [vmem:[%s226 + $0x20] sm:$0xff]
                  %233 = vst [vmem:[%s227 + $0x10] sm:$0xff] %v232
                  %v234 = vld [vmem:[%s226 + $0x30] sm:$0xff]
                  %235 = vst [vmem:[%s227 + $0x18] sm:$0xff] %v234
                  %v236 = vld [vmem:[%s226 + $0x40] sm:$0xff]
                  %237 = vst [vmem:[%s227 + $0x20] sm:$0xff] %v236
                  %v238 = vld [vmem:[%s226 + $0x50] sm:$0xff]
                  %239 = vst [vmem:[%s227 + $0x28] sm:$0xff] %v238
                  %v240 = vld [vmem:[%s226 + $0x60] sm:$0xff]
                  %241 = vst [vmem:[%s227 + $0x30] sm:$0xff] %v240
                  %v242 = vld [vmem:[%s226 + $0x70] sm:$0xff]
                  %243 = vst [vmem:[%s227 + $0x38] sm:$0xff] %v242
                $region56: #{tpu_custom_call.1} parent=50 // loop_footer
                  %s225 = sadd.s32 1, %s221
                $region57: #{tpu_custom_call.1} parent=50 // loop_footer_branch
                  %220 = sbr.rel target = $region53
                $region58: #{tpu_custom_call.1} parent=50 // loop_exit
                  _
              $region51: #{tpu_custom_call.1} parent=35 // pred_fallthru
                _
              // Predicated region
              $region59: #{tpu_custom_call.1} parent=35 // pred_check
                _
              $region60: #{tpu_custom_call.1} parent=35 // pred_check_branch
                %245 = sbr.rel target = $region62
              $region61: #{tpu_custom_call.1} parent=35 // pred_region
                _
              $region62: #{tpu_custom_call.1} parent=35 // pred_fallthru
                _
            $region36: #{tpu_custom_call.1} parent=31 // pred_fallthru
              _
            // Predicated region
            $region37: #{tpu_custom_call.1} parent=31 // pred_check
              _
            $region38: #{tpu_custom_call.1} parent=31 // pred_check_branch
              %191 = sbr.rel target = $region40
            $region39: #{tpu_custom_call.1} parent=31 // pred_region
              %s193 = ssub.s32 256, 1
              loop: start=0, step=1, limit=1
              $region41: #{tpu_custom_call.1} parent=39 // loop_pre_header
                _
              $region42: #{tpu_custom_call.1} parent=39 // loop_header
                %s195 = sphi 0, %s199
                %p196 = scmp.ge.s32.totalorder %s195, 1
                %s200 = sphi %s185, %s185
                %s201 = sphi %s181, %s181
              $region43: #{tpu_custom_call.1} parent=39 // loop_header_branch
                %198 = sbr.rel (%p196) target = $region47
              $region44: #{tpu_custom_call.1} parent=39 // loop_body
                %v202 = vld [vmem:[%s200] sm:%s193]
                %203 = vst [vmem:[%s201] sm:%s193] %v202
                %v204 = vld [vmem:[%s200 + $0x10] sm:%s193]
                %205 = vst [vmem:[%s201 + $0x8] sm:%s193] %v204
                %v206 = vld [vmem:[%s200 + $0x20] sm:%s193]
                %207 = vst [vmem:[%s201 + $0x10] sm:%s193] %v206
                %v208 = vld [vmem:[%s200 + $0x30] sm:%s193]
                %209 = vst [vmem:[%s201 + $0x18] sm:%s193] %v208
                %v210 = vld [vmem:[%s200 + $0x40] sm:%s193]
                %211 = vst [vmem:[%s201 + $0x20] sm:%s193] %v210
                %v212 = vld [vmem:[%s200 + $0x50] sm:%s193]
                %213 = vst [vmem:[%s201 + $0x28] sm:%s193] %v212
                %v214 = vld [vmem:[%s200 + $0x60] sm:%s193]
                %215 = vst [vmem:[%s201 + $0x30] sm:%s193] %v214
                %v216 = vld [vmem:[%s200 + $0x70] sm:%s193]
                %217 = vst [vmem:[%s201 + $0x38] sm:%s193] %v216
              $region45: #{tpu_custom_call.1} parent=39 // loop_footer
                %s199 = sadd.s32 1, %s195
              $region46: #{tpu_custom_call.1} parent=39 // loop_footer_branch
                %194 = sbr.rel target = $region42
              $region47: #{tpu_custom_call.1} parent=39 // loop_exit
                _
            $region40: #{tpu_custom_call.1} parent=31 // pred_fallthru
              _
          $region32: #{tpu_custom_call.1} parent=27 // pred_fallthru
            _
          %246 = vnop
        $region28: #{tpu_custom_call.1} parent=23 // pred_fallthru
          _
        // Predicated region
        $region63: #{tpu_custom_call.1} parent=23 // pred_check
          %p247 = pneg %p74
        $region64: #{tpu_custom_call.1} parent=23 // pred_check_branch
          %249 = sbr.rel (%p247) target = $region66
        $region65: #{tpu_custom_call.1} parent=23 // pred_region
          %s250 = sand.u32 %s64, 1
          %s251 = sand.u32 %s64, 1
          %s252 = smul.addr %s251, 64
          %s253 = scalar_lea.vmem [#allocation3], %s252
          %s254 = sadd.s32 %s18, 1
          %s255 = smul.addr %s17, 16
          %s256 = sadd.s32 %s254, %s255
          %s257 = smul.addr %s256, 8
          %s258 = scalar_lea.vmem %s1, %s257
          // Predicated region
          $region67: #{tpu_custom_call.1} parent=65 // pred_check
            _
          $region68: #{tpu_custom_call.1} parent=65 // pred_check_branch
            %260 = sbr.rel (0) target = $region70
          $region69: #{tpu_custom_call.1} parent=65 // pred_region
            // Predicated region
            $region71: #{tpu_custom_call.1} parent=69 // pred_check
              _
            $region72: #{tpu_custom_call.1} parent=69 // pred_check_branch
              %262 = sbr.rel (0) target = $region74
            $region73: #{tpu_custom_call.1} parent=69 // pred_region
              // Predicated region
              $region86: #{tpu_custom_call.1} parent=73 // pred_check
                _
              $region87: #{tpu_custom_call.1} parent=73 // pred_check_branch
                %292 = sbr.rel (0) target = $region89
              $region88: #{tpu_custom_call.1} parent=73 // pred_region
                loop: start=0, step=1, limit=1
                $region90: #{tpu_custom_call.1} parent=88 // loop_pre_header
                  _
                $region91: #{tpu_custom_call.1} parent=88 // loop_header
                  %s294 = sphi 0, %s298
                  %p295 = scmp.ge.s32.totalorder %s294, 1
                  %s299 = sphi %s258, %s258
                  %s300 = sphi %s253, %s253
                $region92: #{tpu_custom_call.1} parent=88 // loop_header_branch
                  %297 = sbr.rel (%p295) target = $region96
                $region93: #{tpu_custom_call.1} parent=88 // loop_body
                  %v301 = vld [vmem:[%s299] sm:$0xff]
                  %302 = vst [vmem:[%s300] sm:$0xff] %v301
                  %v303 = vld [vmem:[%s299 + $0x10] sm:$0xff]
                  %304 = vst [vmem:[%s300 + $0x8] sm:$0xff] %v303
                  %v305 = vld [vmem:[%s299 + $0x20] sm:$0xff]
                  %306 = vst [vmem:[%s300 + $0x10] sm:$0xff] %v305
                  %v307 = vld [vmem:[%s299 + $0x30] sm:$0xff]
                  %308 = vst [vmem:[%s300 + $0x18] sm:$0xff] %v307
                  %v309 = vld [vmem:[%s299 + $0x40] sm:$0xff]
                  %310 = vst [vmem:[%s300 + $0x20] sm:$0xff] %v309
                  %v311 = vld [vmem:[%s299 + $0x50] sm:$0xff]
                  %312 = vst [vmem:[%s300 + $0x28] sm:$0xff] %v311
                  %v313 = vld [vmem:[%s299 + $0x60] sm:$0xff]
                  %314 = vst [vmem:[%s300 + $0x30] sm:$0xff] %v313
                  %v315 = vld [vmem:[%s299 + $0x70] sm:$0xff]
                  %316 = vst [vmem:[%s300 + $0x38] sm:$0xff] %v315
                $region94: #{tpu_custom_call.1} parent=88 // loop_footer
                  %s298 = sadd.s32 1, %s294
                $region95: #{tpu_custom_call.1} parent=88 // loop_footer_branch
                  %293 = sbr.rel target = $region91
                $region96: #{tpu_custom_call.1} parent=88 // loop_exit
                  _
              $region89: #{tpu_custom_call.1} parent=73 // pred_fallthru
                _
              // Predicated region
              $region97: #{tpu_custom_call.1} parent=73 // pred_check
                _
              $region98: #{tpu_custom_call.1} parent=73 // pred_check_branch
                %318 = sbr.rel target = $region100
              $region99: #{tpu_custom_call.1} parent=73 // pred_region
                _
              $region100: #{tpu_custom_call.1} parent=73 // pred_fallthru
                _
            $region74: #{tpu_custom_call.1} parent=69 // pred_fallthru
              _
            // Predicated region
            $region75: #{tpu_custom_call.1} parent=69 // pred_check
              _
            $region76: #{tpu_custom_call.1} parent=69 // pred_check_branch
              %264 = sbr.rel target = $region78
            $region77: #{tpu_custom_call.1} parent=69 // pred_region
              %s266 = ssub.s32 256, 1
              loop: start=0, step=1, limit=1
              $region79: #{tpu_custom_call.1} parent=77 // loop_pre_header
                _
              $region80: #{tpu_custom_call.1} parent=77 // loop_header
                %s268 = sphi 0, %s272
                %p269 = scmp.ge.s32.totalorder %s268, 1
                %s273 = sphi %s258, %s258
                %s274 = sphi %s253, %s253
              $region81: #{tpu_custom_call.1} parent=77 // loop_header_branch
                %271 = sbr.rel (%p269) target = $region85
              $region82: #{tpu_custom_call.1} parent=77 // loop_body
                %v275 = vld [vmem:[%s273] sm:%s266]
                %276 = vst [vmem:[%s274] sm:%s266] %v275
                %v277 = vld [vmem:[%s273 + $0x10] sm:%s266]
                %278 = vst [vmem:[%s274 + $0x8] sm:%s266] %v277
                %v279 = vld [vmem:[%s273 + $0x20] sm:%s266]
                %280 = vst [vmem:[%s274 + $0x10] sm:%s266] %v279
                %v281 = vld [vmem:[%s273 + $0x30] sm:%s266]
                %282 = vst [vmem:[%s274 + $0x18] sm:%s266] %v281
                %v283 = vld [vmem:[%s273 + $0x40] sm:%s266]
                %284 = vst [vmem:[%s274 + $0x20] sm:%s266] %v283
                %v285 = vld [vmem:[%s273 + $0x50] sm:%s266]
                %286 = vst [vmem:[%s274 + $0x28] sm:%s266] %v285
                %v287 = vld [vmem:[%s273 + $0x60] sm:%s266]
                %288 = vst [vmem:[%s274 + $0x30] sm:%s266] %v287
                %v289 = vld [vmem:[%s273 + $0x70] sm:%s266]
                %290 = vst [vmem:[%s274 + $0x38] sm:%s266] %v289
              $region83: #{tpu_custom_call.1} parent=77 // loop_footer
                %s272 = sadd.s32 1, %s268
              $region84: #{tpu_custom_call.1} parent=77 // loop_footer_branch
                %267 = sbr.rel target = $region80
              $region85: #{tpu_custom_call.1} parent=77 // loop_exit
                _
            $region78: #{tpu_custom_call.1} parent=69 // pred_fallthru
              _
          $region70: #{tpu_custom_call.1} parent=65 // pred_fallthru
            _
          %319 = vnop
        $region66: #{tpu_custom_call.1} parent=23 // pred_fallthru
          _
      $region24: #{tpu_custom_call.1} parent=5 // pred_fallthru
        _
      %p320 = scmp.le.s32.totalorder 1, %s10
      %p321 = scmp.lt.s32.totalorder %s10, 3
      %p322 = pnand %p320, %p321
      %p323 = pneg %p322
      // Predicated region
      $region101: #{tpu_custom_call.1} parent=5 // pred_check
        _
      $region102: #{tpu_custom_call.1} parent=5 // pred_check_branch
        %325 = sbr.rel (%p322) target = $region104
      $region103: #{tpu_custom_call.1} parent=5 // pred_region
        %s326 = ssub.s32 %s10, 1
        %s327 = sand.u32 %s37, 1
        %s328 = sand.u32 %s37, 1
        %s329 = smul.addr %s328, 64
        %s330 = scalar_lea.vmem [#allocation2], %s329
        // Predicated region
        $region105: #{tpu_custom_call.1} parent=103 // pred_check
          %p331 = pneg %p50
        $region106: #{tpu_custom_call.1} parent=103 // pred_check_branch
          %333 = sbr.rel (%p331) target = $region108
        $region107: #{tpu_custom_call.1} parent=103 // pred_region
          _
        $region108: #{tpu_custom_call.1} parent=103 // pred_fallthru
          _
        %s334 = sand.u32 %s67, 1
        %s335 = sand.u32 %s67, 1
        %s336 = smul.addr %s335, 64
        %s337 = scalar_lea.vmem [#allocation3], %s336
        // Predicated region
        $region109: #{tpu_custom_call.1} parent=103 // pred_check
          %p338 = pneg %p80
        $region110: #{tpu_custom_call.1} parent=103 // pred_check_branch
          %340 = sbr.rel (%p338) target = $region112
        $region111: #{tpu_custom_call.1} parent=103 // pred_region
          _
        $region112: #{tpu_custom_call.1} parent=103 // pred_fallthru
          _
        %s341 = sand.u32 %s37, 1
        %s342 = sand.u32 %s37, 1
        %s343 = smul.addr %s342, 64
        %s344 = scalar_lea.vmem [#allocation2], %s343
        %p345 = pneg %p50
        %p346 = pneg %p47
        %s347 = sand.u32 %s67, 1
        %s348 = sand.u32 %s67, 1
        %s349 = smul.addr %s348, 64
        %s350 = scalar_lea.vmem [#allocation3], %s349
        %p351 = pneg %p80
        %p352 = pneg %p77
        %p353 = pneg %p101
        %p354 = pneg %p98
        %p355 = pneg %p122
        %p356 = pneg %p119
        %p357 = pneg %p150
        %p358 = pneg %p147
        %p359 = scmp.lt.s32.totalorder %s19, 1
        %s360 = scalar_select %p359, %s19, 1
        %p361 = scmp.lt.s32.totalorder %s20, 0
        %s362 = scalar_select %p361, %s20, 0
        %s363 = smul.addr %s360, 9
        %s364 = sadd.s32 %s362, %s363
        %s365 = smul.addr %s364, 8
        %s366 = scalar_lea.vmem %s4, %s365
        %s367 = sadd.s32 %s20, 1
        %p368 = scmp.lt.s32.totalorder %s19, 1
        %s369 = scalar_select %p368, %s19, 1
        %p370 = scmp.lt.s32.totalorder %s20, 0
        %s371 = scalar_select %p370, %s20, 0
        %s372 = smul.addr %s369, 9
        %s373 = sadd.s32 %s371, %s372
        %s374 = smul.addr %s373, 8
        %s375 = scalar_lea.vmem %s4, %s374
        %v376 = vld [vmem:[%s330] sm:$0xff]
        %v377 = vld [vmem:[%s330 + $0x8] sm:$0xff]
        %v378 = vld [vmem:[%s330 + $0x10] sm:$0xff]
        %v379 = vld [vmem:[%s330 + $0x18] sm:$0xff]
        %v380 = vld [vmem:[%s330 + $0x20] sm:$0xff]
        %v381 = vld [vmem:[%s330 + $0x28] sm:$0xff]
        %v382 = vld [vmem:[%s330 + $0x30] sm:$0xff]
        %v383 = vld [vmem:[%s330 + $0x38] sm:$0xff]
        %384 = vrot.lane.b32.xlu0 %v376, 127
        %v385 = vpop.permute.xlu0 %384
        %386 = vrot.lane.b32.xlu0 %v377, 127
        %v387 = vpop.permute.xlu0 %386
        %388 = vrot.lane.b32.xlu0 %v378, 127
        %v389 = vpop.permute.xlu0 %388
        %390 = vrot.lane.b32.xlu0 %v379, 127
        %v391 = vpop.permute.xlu0 %390
        %392 = vrot.lane.b32.xlu0 %v380, 127
        %v393 = vpop.permute.xlu0 %392
        %394 = vrot.lane.b32.xlu0 %v381, 127
        %v395 = vpop.permute.xlu0 %394
        %396 = vrot.lane.b32.xlu0 %v382, 127
        %v397 = vpop.permute.xlu0 %396
        %398 = vrot.lane.b32.xlu0 %v383, 127
        %v399 = vpop.permute.xlu0 %398
        %v400 = vlaneseq
        %v401 = vand.u32 %v400, 127
        %vm402 = vcmp.eq.s32.totalorder %v401, 127
        %v403 = vld [vmem:[%s337] sm:$0xff]
        %v404 = vld [vmem:[%s337 + $0x8] sm:$0xff]
        %v405 = vld [vmem:[%s337 + $0x10] sm:$0xff]
        %v406 = vld [vmem:[%s337 + $0x18] sm:$0xff]
        %v407 = vld [vmem:[%s337 + $0x20] sm:$0xff]
        %v408 = vld [vmem:[%s337 + $0x28] sm:$0xff]
        %v409 = vld [vmem:[%s337 + $0x30] sm:$0xff]
        %v410 = vld [vmem:[%s337 + $0x38] sm:$0xff]
        %412 = vset.pattern.permute.xlu0 0
        %413 = vperm.xlu0 %412, %v403
        %v414 = vpop.permute.xlu0 %413
        %417 = vset.pattern.permute.xlu0 0
        %418 = vperm.xlu0 %417, %v404
        %v419 = vpop.permute.xlu0 %418
        %422 = vset.pattern.permute.xlu0 0
        %423 = vperm.xlu0 %422, %v405
        %v424 = vpop.permute.xlu0 %423
        %427 = vset.pattern.permute.xlu0 0
        %428 = vperm.xlu0 %427, %v406
        %v429 = vpop.permute.xlu0 %428
        %432 = vset.pattern.permute.xlu0 0
        %433 = vperm.xlu0 %432, %v407
        %v434 = vpop.permute.xlu0 %433
        %437 = vset.pattern.permute.xlu0 0
        %438 = vperm.xlu0 %437, %v408
        %v439 = vpop.permute.xlu0 %438
        %442 = vset.pattern.permute.xlu0 0
        %443 = vperm.xlu0 %442, %v409
        %v444 = vpop.permute.xlu0 %443
        %447 = vset.pattern.permute.xlu0 0
        %448 = vperm.xlu0 %447, %v410
        %v449 = vpop.permute.xlu0 %448
        %v451 = vsel %vm402, %v414, %v385
        %v452 = vsel %vm402, %v419, %v387
        %v453 = vsel %vm402, %v424, %v389
        %v454 = vsel %vm402, %v429, %v391
        %v455 = vsel %vm402, %v434, %v393
        %v456 = vsel %vm402, %v439, %v395
        %v457 = vsel %vm402, %v444, %v397
        %v458 = vsel %vm402, %v449, %v399
        %v459 = vld [vmem:[%s2] sm:$0xff]
        %v460 = vld [vmem:[%s2 + $0x8] sm:$0xff]
        %v461 = vld [vmem:[%s2 + $0x10] sm:$0xff]
        %v462 = vld [vmem:[%s2 + $0x18] sm:$0xff]
        %v463 = vld [vmem:[%s2 + $0x20] sm:$0xff]
        %v464 = vld [vmem:[%s2 + $0x28] sm:$0xff]
        %v465 = vld [vmem:[%s2 + $0x30] sm:$0xff]
        %v466 = vld [vmem:[%s2 + $0x38] sm:$0xff]
        %v467 = vld [vmem:[%s2 + $0x40] sm:$0xff]
        %v468 = vld [vmem:[%s2 + $0x48] sm:$0xff]
        %v469 = vld [vmem:[%s2 + $0x50] sm:$0xff]
        %v470 = vld [vmem:[%s2 + $0x58] sm:$0xff]
        %v471 = vld [vmem:[%s2 + $0x60] sm:$0xff]
        %v472 = vld [vmem:[%s2 + $0x68] sm:$0xff]
        %v473 = vld [vmem:[%s2 + $0x70] sm:$0xff]
        %v474 = vld [vmem:[%s2 + $0x78] sm:$0xff]
        %v475 = vld [vmem:[%s2 + $0x80] sm:$0xff]
        %v476 = vld [vmem:[%s2 + $0x88] sm:$0xff]
        %v477 = vld [vmem:[%s2 + $0x90] sm:$0xff]
        %v478 = vld [vmem:[%s2 + $0x98] sm:$0xff]
        %v479 = vld [vmem:[%s2 + $0xa0] sm:$0xff]
        %v480 = vld [vmem:[%s2 + $0xa8] sm:$0xff]
        %v481 = vld [vmem:[%s2 + $0xb0] sm:$0xff]
        %v482 = vld [vmem:[%s2 + $0xb8] sm:$0xff]
        %v483 = vld [vmem:[%s2 + $0xc0] sm:$0xff]
        %v484 = vld [vmem:[%s2 + $0xc8] sm:$0xff]
        %v485 = vld [vmem:[%s2 + $0xd0] sm:$0xff]
        %v486 = vld [vmem:[%s2 + $0xd8] sm:$0xff]
        %v487 = vld [vmem:[%s2 + $0xe0] sm:$0xff]
        %v488 = vld [vmem:[%s2 + $0xe8] sm:$0xff]
        %v489 = vld [vmem:[%s2 + $0xf0] sm:$0xff]
        %v490 = vld [vmem:[%s2 + $0xf8] sm:$0xff]
        %v491 = vld [vmem:[%s3] sm:$0xff]
        %v492 = vld [vmem:[%s3 + $0x8] sm:$0xff]
        %v493 = vld [vmem:[%s3 + $0x10] sm:$0xff]
        %v494 = vld [vmem:[%s3 + $0x18] sm:$0xff]
        %v495 = vld [vmem:[%s3 + $0x20] sm:$0xff]
        %v496 = vld [vmem:[%s3 + $0x28] sm:$0xff]
        %v497 = vld [vmem:[%s3 + $0x30] sm:$0xff]
        %v498 = vld [vmem:[%s3 + $0x38] sm:$0xff]
        %v499 = vld [vmem:[%s3 + $0x40] sm:$0xff]
        %v500 = vld [vmem:[%s3 + $0x48] sm:$0xff]
        %v501 = vld [vmem:[%s3 + $0x50] sm:$0xff]
        %v502 = vld [vmem:[%s3 + $0x58] sm:$0xff]
        %v503 = vld [vmem:[%s3 + $0x60] sm:$0xff]
        %v504 = vld [vmem:[%s3 + $0x68] sm:$0xff]
        %v505 = vld [vmem:[%s3 + $0x70] sm:$0xff]
        %v506 = vld [vmem:[%s3 + $0x78] sm:$0xff]
        %v507 = vld [vmem:[%s3 + $0x80] sm:$0xff]
        %v508 = vld [vmem:[%s3 + $0x88] sm:$0xff]
        %v509 = vld [vmem:[%s3 + $0x90] sm:$0xff]
        %v510 = vld [vmem:[%s3 + $0x98] sm:$0xff]
        %v511 = vld [vmem:[%s3 + $0xa0] sm:$0xff]
        %v512 = vld [vmem:[%s3 + $0xa8] sm:$0xff]
        %v513 = vld [vmem:[%s3 + $0xb0] sm:$0xff]
        %v514 = vld [vmem:[%s3 + $0xb8] sm:$0xff]
        %v515 = vld [vmem:[%s3 + $0xc0] sm:$0xff]
        %v516 = vld [vmem:[%s3 + $0xc8] sm:$0xff]
        %v517 = vld [vmem:[%s3 + $0xd0] sm:$0xff]
        %v518 = vld [vmem:[%s3 + $0xd8] sm:$0xff]
        %v519 = vld [vmem:[%s3 + $0xe0] sm:$0xff]
        %v520 = vld [vmem:[%s3 + $0xe8] sm:$0xff]
        %v521 = vld [vmem:[%s3 + $0xf0] sm:$0xff]
        %v522 = vld [vmem:[%s3 + $0xf8] sm:$0xff]
        %vm523 = vcmask 523264
        %v525 = vsel %vm523, %v491, 0
        %v528 = vsel %vm523, %v492, 0
        %v531 = vsel %vm523, %v493, 0
        %v534 = vsel %vm523, %v494, 0
        %v537 = vsel %vm523, %v495, 0
        %v540 = vsel %vm523, %v496, 0
        %v543 = vsel %vm523, %v497, 0
        %v546 = vsel %vm523, %v498, 0
        %v549 = vsel %vm523, %v499, 0
        %v552 = vsel %vm523, %v500, 0
        %v555 = vsel %vm523, %v501, 0
        %v558 = vsel %vm523, %v502, 0
        %v561 = vsel %vm523, %v503, 0
        %v564 = vsel %vm523, %v504, 0
        %v567 = vsel %vm523, %v505, 0
        %v570 = vsel %vm523, %v506, 0
        %v573 = vsel %vm523, %v507, 0
        %v576 = vsel %vm523, %v508, 0
        %v579 = vsel %vm523, %v509, 0
        %v582 = vsel %vm523, %v510, 0
        %v585 = vsel %vm523, %v511, 0
        %v588 = vsel %vm523, %v512, 0
        %v591 = vsel %vm523, %v513, 0
        %v594 = vsel %vm523, %v514, 0
        %v597 = vsel %vm523, %v515, 0
        %v600 = vsel %vm523, %v516, 0
        %v603 = vsel %vm523, %v517, 0
        %v606 = vsel %vm523, %v518, 0
        %v609 = vsel %vm523, %v519, 0
        %v612 = vsel %vm523, %v520, 0
        %v615 = vsel %vm523, %v521, 0
        %v618 = vsel %vm523, %v522, 0
        %620 = vmatpush.msra.mxu0 0.0
        %621 = vmatpush.msra.mxu0 0.0
        %622 = vmatpush.msra.mxu0 0.0
        %623 = vmatpush.msra.mxu0 0.0
        %624 = vmatpush.msra.mxu0 0.0
        %625 = vmatpush.msra.mxu0 0.0
        %626 = vmatpush.msra.mxu0 0.0
        %627 = vmatpush.msra.mxu0 0.0
        %v628 = vand.u32 %v458, 4294901760
        %629 = vmatpush.msra.mxu0 %v628
        %v630 = vand.u32 %v457, 4294901760
        %631 = vmatpush.msra.mxu0 %v630
        %v632 = vand.u32 %v456, 4294901760
        %633 = vmatpush.msra.mxu0 %v632
        %v634 = vand.u32 %v455, 4294901760
        %635 = vmatpush.msra.mxu0 %v634
        %v636 = vand.u32 %v454, 4294901760
        %637 = vmatpush.msra.mxu0 %v636
        %v638 = vand.u32 %v453, 4294901760
        %639 = vmatpush.msra.mxu0 %v638
        %v640 = vand.u32 %v452, 4294901760
        %641 = vmatpush.msra.mxu0 %v640
        %v642 = vand.u32 %v451, 4294901760
        %643 = vmatpush.msra.mxu0 %v642
        %v644 = vand.u32 %v525, 4294901760
        %v645 = vsub.f32 %v525, %v644
        %v646 = vand.u32 %v645, 4294901760
        %v647 = vsub.f32 %v645, %v646
        %v648 = vand.u32 %v647, 4294901760
        %649 = vmatmul.f32.gmra.mxu0 %v648
        %v650 = vpop.f32.mrf.mxu0
        %v651 = vadd.f32 0.0, %v650
        %v652 = vand.u32 %v528, 4294901760
        %v653 = vsub.f32 %v528, %v652
        %v654 = vand.u32 %v653, 4294901760
        %v655 = vsub.f32 %v653, %v654
        %v656 = vand.u32 %v655, 4294901760
        %657 = vmatmul.f32.gmra.mxu0 %v656
        %v658 = vpop.f32.mrf.mxu0
        %v659 = vadd.f32 0.0, %v658
        %v660 = vand.u32 %v531, 4294901760
        %v661 = vsub.f32 %v531, %v660
        %v662 = vand.u32 %v661, 4294901760
        %v663 = vsub.f32 %v661, %v662
        %v664 = vand.u32 %v663, 4294901760
        %665 = vmatmul.f32.gmra.mxu0 %v664
        %v666 = vpop.f32.mrf.mxu0
        %v667 = vadd.f32 0.0, %v666
        %v668 = vand.u32 %v534, 4294901760
        %v669 = vsub.f32 %v534, %v668
        %v670 = vand.u32 %v669, 4294901760
        %v671 = vsub.f32 %v669, %v670
        %v672 = vand.u32 %v671, 4294901760
        %673 = vmatmul.f32.gmra.mxu0 %v672
        %v674 = vpop.f32.mrf.mxu0
        %v675 = vadd.f32 0.0, %v674
        %v676 = vand.u32 %v537, 4294901760
        %v677 = vsub.f32 %v537, %v676
        %v678 = vand.u32 %v677, 4294901760
        %v679 = vsub.f32 %v677, %v678
        %v680 = vand.u32 %v679, 4294901760
        %681 = vmatmul.f32.gmra.mxu0 %v680
        %v682 = vpop.f32.mrf.mxu0
        %v683 = vadd.f32 0.0, %v682
        %v684 = vand.u32 %v540, 4294901760
        %v685 = vsub.f32 %v540, %v684
        %v686 = vand.u32 %v685, 4294901760
        %v687 = vsub.f32 %v685, %v686
        %v688 = vand.u32 %v687, 4294901760
        %689 = vmatmul.f32.gmra.mxu0 %v688
        %v690 = vpop.f32.mrf.mxu0
        %v691 = vadd.f32 0.0, %v690
        %v692 = vand.u32 %v543, 4294901760
        %v693 = vsub.f32 %v543, %v692
        %v694 = vand.u32 %v693, 4294901760
        %v695 = vsub.f32 %v693, %v694
        %v696 = vand.u32 %v695, 4294901760
        %697 = vmatmul.f32.gmra.mxu0 %v696
        %v698 = vpop.f32.mrf.mxu0
        %v699 = vadd.f32 0.0, %v698
        %v700 = vand.u32 %v546, 4294901760
        %v701 = vsub.f32 %v546, %v700
        %v702 = vand.u32 %v701, 4294901760
        %v703 = vsub.f32 %v701, %v702
        %v704 = vand.u32 %v703, 4294901760
        %705 = vmatmul.f32.gmra.mxu0 %v704
        %v706 = vpop.f32.mrf.mxu0
        %v707 = vadd.f32 0.0, %v706
        %v708 = vand.u32 %v549, 4294901760
        %v709 = vsub.f32 %v549, %v708
        %v710 = vand.u32 %v709, 4294901760
        %v711 = vsub.f32 %v709, %v710
        %v712 = vand.u32 %v711, 4294901760
        %713 = vmatmul.f32.gmra.mxu0 %v712
        %v714 = vpop.f32.mrf.mxu0
        %v715 = vadd.f32 0.0, %v714
        %v716 = vand.u32 %v552, 4294901760
        %v717 = vsub.f32 %v552, %v716
        %v718 = vand.u32 %v717, 4294901760
        %v719 = vsub.f32 %v717, %v718
        %v720 = vand.u32 %v719, 4294901760
        %721 = vmatmul.f32.gmra.mxu0 %v720
        %v722 = vpop.f32.mrf.mxu0
        %v723 = vand.u32 %v555, 4294901760
        %v724 = vsub.f32 %v555, %v723
        %v725 = vand.u32 %v724, 4294901760
        %v726 = vsub.f32 %v724, %v725
        %v727 = vand.u32 %v726, 4294901760
        %728 = vmatmul.f32.gmra.mxu0 %v727
        %v729 = vpop.f32.mrf.mxu0
        %v730 = vand.u32 %v558, 4294901760
        %v731 = vsub.f32 %v558, %v730
        %v732 = vand.u32 %v731, 4294901760
        %v733 = vsub.f32 %v731, %v732
        %v734 = vand.u32 %v733, 4294901760
        %735 = vmatmul.f32.gmra.mxu0 %v734
        %v736 = vpop.f32.mrf.mxu0
        %v737 = vand.u32 %v561, 4294901760
        %v738 = vsub.f32 %v561, %v737
        %v739 = vand.u32 %v738, 4294901760
        %v740 = vsub.f32 %v738, %v739
        %v741 = vand.u32 %v740, 4294901760
        %742 = vmatmul.f32.gmra.mxu0 %v741
        %v743 = vpop.f32.mrf.mxu0
        %v744 = vand.u32 %v564, 4294901760
        %v745 = vsub.f32 %v564, %v744
        %v746 = vand.u32 %v745, 4294901760
        %v747 = vsub.f32 %v745, %v746
        %v748 = vand.u32 %v747, 4294901760
        %749 = vmatmul.f32.gmra.mxu0 %v748
        %v750 = vpop.f32.mrf.mxu0
        %v751 = vand.u32 %v567, 4294901760
        %v752 = vsub.f32 %v567, %v751
        %v753 = vand.u32 %v752, 4294901760
        %v754 = vsub.f32 %v752, %v753
        %v755 = vand.u32 %v754, 4294901760
        %756 = vmatmul.f32.gmra.mxu0 %v755
        %v757 = vpop.f32.mrf.mxu0
        %v758 = vand.u32 %v570, 4294901760
        %v759 = vsub.f32 %v570, %v758
        %v760 = vand.u32 %v759, 4294901760
        %v761 = vsub.f32 %v759, %v760
        %v762 = vand.u32 %v761, 4294901760
        %763 = vmatmul.f32.gmra.mxu0 %v762
        %v764 = vpop.f32.mrf.mxu0
        %v765 = vand.u32 %v573, 4294901760
        %v766 = vsub.f32 %v573, %v765
        %v767 = vand.u32 %v766, 4294901760
        %v768 = vsub.f32 %v766, %v767
        %v769 = vand.u32 %v768, 4294901760
        %770 = vmatmul.f32.gmra.mxu0 %v769
        %v771 = vpop.f32.mrf.mxu0
        %v772 = vadd.f32 0.0, %v771
        %v773 = vand.u32 %v576, 4294901760
        %v774 = vsub.f32 %v576, %v773
        %v775 = vand.u32 %v774, 4294901760
        %v776 = vsub.f32 %v774, %v775
        %v777 = vand.u32 %v776, 4294901760
        %778 = vmatmul.f32.gmra.mxu0 %v777
        %v779 = vpop.f32.mrf.mxu0
        %v780 = vadd.f32 0.0, %v779
        %v781 = vand.u32 %v579, 4294901760
        %v782 = vsub.f32 %v579, %v781
        %v783 = vand.u32 %v782, 4294901760
        %v784 = vsub.f32 %v782, %v783
        %v785 = vand.u32 %v784, 4294901760
        %786 = vmatmul.f32.gmra.mxu0 %v785
        %v787 = vpop.f32.mrf.mxu0
        %v788 = vadd.f32 0.0, %v787
        %v789 = vand.u32 %v582, 4294901760
        %v790 = vsub.f32 %v582, %v789
        %v791 = vand.u32 %v790, 4294901760
        %v792 = vsub.f32 %v790, %v791
        %v793 = vand.u32 %v792, 4294901760
        %794 = vmatmul.f32.gmra.mxu0 %v793
        %v795 = vpop.f32.mrf.mxu0
        %v796 = vadd.f32 0.0, %v795
        %v797 = vand.u32 %v585, 4294901760
        %v798 = vsub.f32 %v585, %v797
        %v799 = vand.u32 %v798, 4294901760
        %v800 = vsub.f32 %v798, %v799
        %v801 = vand.u32 %v800, 4294901760
        %802 = vmatmul.f32.gmra.mxu0 %v801
        %v803 = vpop.f32.mrf.mxu0
        %v804 = vadd.f32 0.0, %v803
        %v805 = vand.u32 %v588, 4294901760
        %v806 = vsub.f32 %v588, %v805
        %v807 = vand.u32 %v806, 4294901760
        %v808 = vsub.f32 %v806, %v807
        %v809 = vand.u32 %v808, 4294901760
        %810 = vmatmul.f32.gmra.mxu0 %v809
        %v811 = vpop.f32.mrf.mxu0
        %v812 = vadd.f32 0.0, %v811
        %v813 = vand.u32 %v591, 4294901760
        %v814 = vsub.f32 %v591, %v813
        %v815 = vand.u32 %v814, 4294901760
        %v816 = vsub.f32 %v814, %v815
        %v817 = vand.u32 %v816, 4294901760
        %818 = vmatmul.f32.gmra.mxu0 %v817
        %v819 = vpop.f32.mrf.mxu0
        %v820 = vadd.f32 0.0, %v819
        %v821 = vand.u32 %v594, 4294901760
        %v822 = vsub.f32 %v594, %v821
        %v823 = vand.u32 %v822, 4294901760
        %v824 = vsub.f32 %v822, %v823
        %v825 = vand.u32 %v824, 4294901760
        %826 = vmatmul.f32.gmra.mxu0 %v825
        %v827 = vpop.f32.mrf.mxu0
        %v828 = vadd.f32 0.0, %v827
        %v829 = vand.u32 %v597, 4294901760
        %v830 = vsub.f32 %v597, %v829
        %v831 = vand.u32 %v830, 4294901760
        %v832 = vsub.f32 %v830, %v831
        %v833 = vand.u32 %v832, 4294901760
        %834 = vmatmul.f32.gmra.mxu0 %v833
        %v835 = vpop.f32.mrf.mxu0
        %v836 = vadd.f32 0.0, %v835
        %v837 = vand.u32 %v600, 4294901760
        %v838 = vsub.f32 %v600, %v837
        %v839 = vand.u32 %v838, 4294901760
        %v840 = vsub.f32 %v838, %v839
        %v841 = vand.u32 %v840, 4294901760
        %842 = vmatmul.f32.gmra.mxu0 %v841
        %v843 = vpop.f32.mrf.mxu0
        %v844 = vand.u32 %v603, 4294901760
        %v845 = vsub.f32 %v603, %v844
        %v846 = vand.u32 %v845, 4294901760
        %v847 = vsub.f32 %v845, %v846
        %v848 = vand.u32 %v847, 4294901760
        %849 = vmatmul.f32.gmra.mxu0 %v848
        %v850 = vpop.f32.mrf.mxu0
        %v851 = vand.u32 %v606, 4294901760
        %v852 = vsub.f32 %v606, %v851
        %v853 = vand.u32 %v852, 4294901760
        %v854 = vsub.f32 %v852, %v853
        %v855 = vand.u32 %v854, 4294901760
        %856 = vmatmul.f32.gmra.mxu0 %v855
        %v857 = vpop.f32.mrf.mxu0
        %v858 = vand.u32 %v609, 4294901760
        %v859 = vsub.f32 %v609, %v858
        %v860 = vand.u32 %v859, 4294901760
        %v861 = vsub.f32 %v859, %v860
        %v862 = vand.u32 %v861, 4294901760
        %863 = vmatmul.f32.gmra.mxu0 %v862
        %v864 = vpop.f32.mrf.mxu0
        %v865 = vand.u32 %v612, 4294901760
        %v866 = vsub.f32 %v612, %v865
        %v867 = vand.u32 %v866, 4294901760
        %v868 = vsub.f32 %v866, %v867
        %v869 = vand.u32 %v868, 4294901760
        %870 = vmatmul.f32.gmra.mxu0 %v869
        %v871 = vpop.f32.mrf.mxu0
        %v872 = vand.u32 %v615, 4294901760
        %v873 = vsub.f32 %v615, %v872
        %v874 = vand.u32 %v873, 4294901760
        %v875 = vsub.f32 %v873, %v874
        %v876 = vand.u32 %v875, 4294901760
        %877 = vmatmul.f32.gmra.mxu0 %v876
        %v878 = vpop.f32.mrf.mxu0
        %v879 = vand.u32 %v618, 4294901760
        %v880 = vsub.f32 %v618, %v879
        %v881 = vand.u32 %v880, 4294901760
        %v882 = vsub.f32 %v880, %v881
        %v883 = vand.u32 %v882, 4294901760
        %884 = vmatmul.f32.gmra.mxu0 %v883
        %v885 = vpop.f32.mrf.mxu0
        %886 = vdwg.mxu0
        %887 = vmatpush.msra.mxu0 0.0
        %888 = vmatpush.msra.mxu0 0.0
        %889 = vmatpush.msra.mxu0 0.0
        %890 = vmatpush.msra.mxu0 0.0
        %891 = vmatpush.msra.mxu0 0.0
        %892 = vmatpush.msra.mxu0 0.0
        %893 = vmatpush.msra.mxu0 0.0
        %894 = vmatpush.msra.mxu0 0.0
        %v895 = vand.u32 %v458, 4294901760
        %v896 = vsub.f32 %v458, %v895
        %v897 = vand.u32 %v896, 4294901760
        %v898 = vsub.f32 %v896, %v897
        %v899 = vand.u32 %v898, 4294901760
        %900 = vmatpush.msra.mxu0 %v899
        %v901 = vand.u32 %v457, 4294901760
        %v902 = vsub.f32 %v457, %v901
        %v903 = vand.u32 %v902, 4294901760
        %v904 = vsub.f32 %v902, %v903
        %v905 = vand.u32 %v904, 4294901760
        %906 = vmatpush.msra.mxu0 %v905
        %v907 = vand.u32 %v456, 4294901760
        %v908 = vsub.f32 %v456, %v907
        %v909 = vand.u32 %v908, 4294901760
        %v910 = vsub.f32 %v908, %v909
        %v911 = vand.u32 %v910, 4294901760
        %912 = vmatpush.msra.mxu0 %v911
        %v913 = vand.u32 %v455, 4294901760
        %v914 = vsub.f32 %v455, %v913
        %v915 = vand.u32 %v914, 4294901760
        %v916 = vsub.f32 %v914, %v915
        %v917 = vand.u32 %v916, 4294901760
        %918 = vmatpush.msra.mxu0 %v917
        %v919 = vand.u32 %v454, 4294901760
        %v920 = vsub.f32 %v454, %v919
        %v921 = vand.u32 %v920, 4294901760
        %v922 = vsub.f32 %v920, %v921
        %v923 = vand.u32 %v922, 4294901760
        %924 = vmatpush.msra.mxu0 %v923
        %v925 = vand.u32 %v453, 4294901760
        %v926 = vsub.f32 %v453, %v925
        %v927 = vand.u32 %v926, 4294901760
        %v928 = vsub.f32 %v926, %v927
        %v929 = vand.u32 %v928, 4294901760
        %930 = vmatpush.msra.mxu0 %v929
        %v931 = vand.u32 %v452, 4294901760
        %v932 = vsub.f32 %v452, %v931
        %v933 = vand.u32 %v932, 4294901760
        %v934 = vsub.f32 %v932, %v933
        %v935 = vand.u32 %v934, 4294901760
        %936 = vmatpush.msra.mxu0 %v935
        %v937 = vand.u32 %v451, 4294901760
        %v938 = vsub.f32 %v451, %v937
        %v939 = vand.u32 %v938, 4294901760
        %v940 = vsub.f32 %v938, %v939
        %v941 = vand.u32 %v940, 4294901760
        %942 = vmatpush.msra.mxu0 %v941
        %v943 = vand.u32 %v525, 4294901760
        %944 = vmatmul.f32.gmra.mxu0 %v943
        %v945 = vpop.f32.mrf.mxu0
        %v946 = vadd.f32 %v651, %v945
        %v947 = vand.u32 %v528, 4294901760
        %948 = vmatmul.f32.gmra.mxu0 %v947
        %v949 = vpop.f32.mrf.mxu0
        %v950 = vadd.f32 %v659, %v949
        %v951 = vand.u32 %v531, 4294901760
        %952 = vmatmul.f32.gmra.mxu0 %v951
        %v953 = vpop.f32.mrf.mxu0
        %v954 = vadd.f32 %v667, %v953
        %v955 = vand.u32 %v534, 4294901760
        %956 = vmatmul.f32.gmra.mxu0 %v955
        %v957 = vpop.f32.mrf.mxu0
        %v958 = vadd.f32 %v675, %v957
        %v959 = vand.u32 %v537, 4294901760
        %960 = vmatmul.f32.gmra.mxu0 %v959
        %v961 = vpop.f32.mrf.mxu0
        %v962 = vadd.f32 %v683, %v961
        %v963 = vand.u32 %v540, 4294901760
        %964 = vmatmul.f32.gmra.mxu0 %v963
        %v965 = vpop.f32.mrf.mxu0
        %v966 = vadd.f32 %v691, %v965
        %v967 = vand.u32 %v543, 4294901760
        %968 = vmatmul.f32.gmra.mxu0 %v967
        %v969 = vpop.f32.mrf.mxu0
        %v970 = vadd.f32 %v699, %v969
        %v971 = vand.u32 %v546, 4294901760
        %972 = vmatmul.f32.gmra.mxu0 %v971
        %v973 = vpop.f32.mrf.mxu0
        %v974 = vadd.f32 %v707, %v973
        %v975 = vand.u32 %v549, 4294901760
        %976 = vmatmul.f32.gmra.mxu0 %v975
        %v977 = vpop.f32.mrf.mxu0
        %v978 = vadd.f32 %v715, %v977
        %v979 = vand.u32 %v552, 4294901760
        %980 = vmatmul.f32.gmra.mxu0 %v979
        %v981 = vpop.f32.mrf.mxu0
        %v982 = vand.u32 %v555, 4294901760
        %983 = vmatmul.f32.gmra.mxu0 %v982
        %v984 = vpop.f32.mrf.mxu0
        %v985 = vand.u32 %v558, 4294901760
        %986 = vmatmul.f32.gmra.mxu0 %v985
        %v987 = vpop.f32.mrf.mxu0
        %v988 = vand.u32 %v561, 4294901760
        %989 = vmatmul.f32.gmra.mxu0 %v988
        %v990 = vpop.f32.mrf.mxu0
        %v991 = vand.u32 %v564, 4294901760
        %992 = vmatmul.f32.gmra.mxu0 %v991
        %v993 = vpop.f32.mrf.mxu0
        %v994 = vand.u32 %v567, 4294901760
        %995 = vmatmul.f32.gmra.mxu0 %v994
        %v996 = vpop.f32.mrf.mxu0
        %v997 = vand.u32 %v570, 4294901760
        %998 = vmatmul.f32.gmra.mxu0 %v997
        %v999 = vpop.f32.mrf.mxu0
        %v1000 = vand.u32 %v573, 4294901760
        %1001 = vmatmul.f32.gmra.mxu0 %v1000
        %v1002 = vpop.f32.mrf.mxu0
        %v1003 = vadd.f32 %v772, %v1002
        %v1004 = vand.u32 %v576, 4294901760
        %1005 = vmatmul.f32.gmra.mxu0 %v1004
        %v1006 = vpop.f32.mrf.mxu0
        %v1007 = vadd.f32 %v780, %v1006
        %v1008 = vand.u32 %v579, 4294901760
        %1009 = vmatmul.f32.gmra.mxu0 %v1008
        %v1010 = vpop.f32.mrf.mxu0
        %v1011 = vadd.f32 %v788, %v1010
        %v1012 = vand.u32 %v582, 4294901760
        %1013 = vmatmul.f32.gmra.mxu0 %v1012
        %v1014 = vpop.f32.mrf.mxu0
        %v1015 = vadd.f32 %v796, %v1014
        %v1016 = vand.u32 %v585, 4294901760
        %1017 = vmatmul.f32.gmra.mxu0 %v1016
        %v1018 = vpop.f32.mrf.mxu0
        %v1019 = vadd.f32 %v804, %v1018
        %v1020 = vand.u32 %v588, 4294901760
        %1021 = vmatmul.f32.gmra.mxu0 %v1020
        %v1022 = vpop.f32.mrf.mxu0
        %v1023 = vadd.f32 %v812, %v1022
        %v1024 = vand.u32 %v591, 4294901760
        %1025 = vmatmul.f32.gmra.mxu0 %v1024
        %v1026 = vpop.f32.mrf.mxu0
        %v1027 = vadd.f32 %v820, %v1026
        %v1028 = vand.u32 %v594, 4294901760
        %1029 = vmatmul.f32.gmra.mxu0 %v1028
        %v1030 = vpop.f32.mrf.mxu0
        %v1031 = vadd.f32 %v828, %v1030
        %v1032 = vand.u32 %v597, 4294901760
        %1033 = vmatmul.f32.gmra.mxu0 %v1032
        %v1034 = vpop.f32.mrf.mxu0
        %v1035 = vadd.f32 %v836, %v1034
        %v1036 = vand.u32 %v600, 4294901760
        %1037 = vmatmul.f32.gmra.mxu0 %v1036
        %v1038 = vpop.f32.mrf.mxu0
        %v1039 = vand.u32 %v603, 4294901760
        %1040 = vmatmul.f32.gmra.mxu0 %v1039
        %v1041 = vpop.f32.mrf.mxu0
        %v1042 = vand.u32 %v606, 4294901760
        %1043 = vmatmul.f32.gmra.mxu0 %v1042
        %v1044 = vpop.f32.mrf.mxu0
        %v1045 = vand.u32 %v609, 4294901760
        %1046 = vmatmul.f32.gmra.mxu0 %v1045
        %v1047 = vpop.f32.mrf.mxu0
        %v1048 = vand.u32 %v612, 4294901760
        %1049 = vmatmul.f32.gmra.mxu0 %v1048
        %v1050 = vpop.f32.mrf.mxu0
        %v1051 = vand.u32 %v615, 4294901760
        %1052 = vmatmul.f32.gmra.mxu0 %v1051
        %v1053 = vpop.f32.mrf.mxu0
        %v1054 = vand.u32 %v618, 4294901760
        %1055 = vmatmul.f32.gmra.mxu0 %v1054
        %v1056 = vpop.f32.mrf.mxu0
        %1057 = vdwg.mxu0
        %1058 = vmatpush.msra.mxu0 0.0
        %1059 = vmatpush.msra.mxu0 0.0
        %1060 = vmatpush.msra.mxu0 0.0
        %1061 = vmatpush.msra.mxu0 0.0
        %1062 = vmatpush.msra.mxu0 0.0
        %1063 = vmatpush.msra.mxu0 0.0
        %1064 = vmatpush.msra.mxu0 0.0
        %1065 = vmatpush.msra.mxu0 0.0
        %v1066 = vand.u32 %v458, 4294901760
        %v1067 = vsub.f32 %v458, %v1066
        %1068 = vmatpush.msra.mxu0 %v1067
        %v1069 = vand.u32 %v457, 4294901760
        %v1070 = vsub.f32 %v457, %v1069
        %1071 = vmatpush.msra.mxu0 %v1070
        %v1072 = vand.u32 %v456, 4294901760
        %v1073 = vsub.f32 %v456, %v1072
        %1074 = vmatpush.msra.mxu0 %v1073
        %v1075 = vand.u32 %v455, 4294901760
        %v1076 = vsub.f32 %v455, %v1075
        %1077 = vmatpush.msra.mxu0 %v1076
        %v1078 = vand.u32 %v454, 4294901760
        %v1079 = vsub.f32 %v454, %v1078
        %1080 = vmatpush.msra.mxu0 %v1079
        %v1081 = vand.u32 %v453, 4294901760
        %v1082 = vsub.f32 %v453, %v1081
        %1083 = vmatpush.msra.mxu0 %v1082
        %v1084 = vand.u32 %v452, 4294901760
        %v1085 = vsub.f32 %v452, %v1084
        %1086 = vmatpush.msra.mxu0 %v1085
        %v1087 = vand.u32 %v451, 4294901760
        %v1088 = vsub.f32 %v451, %v1087
        %1089 = vmatpush.msra.mxu0 %v1088
        %v1090 = vand.u32 %v525, 4294901760
        %v1091 = vsub.f32 %v525, %v1090
        %1092 = vmatmul.f32.gmra.mxu0 %v1091
        %v1093 = vpop.f32.mrf.mxu0
        %v1094 = vadd.f32 %v946, %v1093
        %v1095 = vand.u32 %v528, 4294901760
        %v1096 = vsub.f32 %v528, %v1095
        %1097 = vmatmul.f32.gmra.mxu0 %v1096
        %v1098 = vpop.f32.mrf.mxu0
        %v1099 = vadd.f32 %v950, %v1098
        %v1100 = vand.u32 %v531, 4294901760
        %v1101 = vsub.f32 %v531, %v1100
        %1102 = vmatmul.f32.gmra.mxu0 %v1101
        %v1103 = vpop.f32.mrf.mxu0
        %v1104 = vadd.f32 %v954, %v1103
        %v1105 = vand.u32 %v534, 4294901760
        %v1106 = vsub.f32 %v534, %v1105
        %1107 = vmatmul.f32.gmra.mxu0 %v1106
        %v1108 = vpop.f32.mrf.mxu0
        %v1109 = vadd.f32 %v958, %v1108
        %v1110 = vand.u32 %v537, 4294901760
        %v1111 = vsub.f32 %v537, %v1110
        %1112 = vmatmul.f32.gmra.mxu0 %v1111
        %v1113 = vpop.f32.mrf.mxu0
        %v1114 = vadd.f32 %v962, %v1113
        %v1115 = vand.u32 %v540, 4294901760
        %v1116 = vsub.f32 %v540, %v1115
        %1117 = vmatmul.f32.gmra.mxu0 %v1116
        %v1118 = vpop.f32.mrf.mxu0
        %v1119 = vadd.f32 %v966, %v1118
        %v1120 = vand.u32 %v543, 4294901760
        %v1121 = vsub.f32 %v543, %v1120
        %1122 = vmatmul.f32.gmra.mxu0 %v1121
        %v1123 = vpop.f32.mrf.mxu0
        %v1124 = vadd.f32 %v970, %v1123
        %v1125 = vand.u32 %v546, 4294901760
        %v1126 = vsub.f32 %v546, %v1125
        %1127 = vmatmul.f32.gmra.mxu0 %v1126
        %v1128 = vpop.f32.mrf.mxu0
        %v1129 = vadd.f32 %v974, %v1128
        %v1130 = vand.u32 %v549, 4294901760
        %v1131 = vsub.f32 %v549, %v1130
        %1132 = vmatmul.f32.gmra.mxu0 %v1131
        %v1133 = vpop.f32.mrf.mxu0
        %v1134 = vadd.f32 %v978, %v1133
        %v1135 = vand.u32 %v552, 4294901760
        %v1136 = vsub.f32 %v552, %v1135
        %1137 = vmatmul.f32.gmra.mxu0 %v1136
        %v1138 = vpop.f32.mrf.mxu0
        %v1139 = vand.u32 %v555, 4294901760
        %v1140 = vsub.f32 %v555, %v1139
        %1141 = vmatmul.f32.gmra.mxu0 %v1140
        %v1142 = vpop.f32.mrf.mxu0
        %v1143 = vand.u32 %v558, 4294901760
        %v1144 = vsub.f32 %v558, %v1143
        %1145 = vmatmul.f32.gmra.mxu0 %v1144
        %v1146 = vpop.f32.mrf.mxu0
        %v1147 = vand.u32 %v561, 4294901760
        %v1148 = vsub.f32 %v561, %v1147
        %1149 = vmatmul.f32.gmra.mxu0 %v1148
        %v1150 = vpop.f32.mrf.mxu0
        %v1151 = vand.u32 %v564, 4294901760
        %v1152 = vsub.f32 %v564, %v1151
        %1153 = vmatmul.f32.gmra.mxu0 %v1152
        %v1154 = vpop.f32.mrf.mxu0
        %v1155 = vand.u32 %v567, 4294901760
        %v1156 = vsub.f32 %v567, %v1155
        %1157 = vmatmul.f32.gmra.mxu0 %v1156
        %v1158 = vpop.f32.mrf.mxu0
        %v1159 = vand.u32 %v570, 4294901760
        %v1160 = vsub.f32 %v570, %v1159
        %1161 = vmatmul.f32.gmra.mxu0 %v1160
        %v1162 = vpop.f32.mrf.mxu0
        %v1163 = vand.u32 %v573, 4294901760
        %v1164 = vsub.f32 %v573, %v1163
        %1165 = vmatmul.f32.gmra.mxu0 %v1164
        %v1166 = vpop.f32.mrf.mxu0
        %v1167 = vadd.f32 %v1003, %v1166
        %v1168 = vand.u32 %v576, 4294901760
        %v1169 = vsub.f32 %v576, %v1168
        %1170 = vmatmul.f32.gmra.mxu0 %v1169
        %v1171 = vpop.f32.mrf.mxu0
        %v1172 = vadd.f32 %v1007, %v1171
        %v1173 = vand.u32 %v579, 4294901760
        %v1174 = vsub.f32 %v579, %v1173
        %1175 = vmatmul.f32.gmra.mxu0 %v1174
        %v1176 = vpop.f32.mrf.mxu0
        %v1177 = vadd.f32 %v1011, %v1176
        %v1178 = vand.u32 %v582, 4294901760
        %v1179 = vsub.f32 %v582, %v1178
        %1180 = vmatmul.f32.gmra.mxu0 %v1179
        %v1181 = vpop.f32.mrf.mxu0
        %v1182 = vadd.f32 %v1015, %v1181
        %v1183 = vand.u32 %v585, 4294901760
        %v1184 = vsub.f32 %v585, %v1183
        %1185 = vmatmul.f32.gmra.mxu0 %v1184
        %v1186 = vpop.f32.mrf.mxu0
        %v1187 = vadd.f32 %v1019, %v1186
        %v1188 = vand.u32 %v588, 4294901760
        %v1189 = vsub.f32 %v588, %v1188
        %1190 = vmatmul.f32.gmra.mxu0 %v1189
        %v1191 = vpop.f32.mrf.mxu0
        %v1192 = vadd.f32 %v1023, %v1191
        %v1193 = vand.u32 %v591, 4294901760
        %v1194 = vsub.f32 %v591, %v1193
        %1195 = vmatmul.f32.gmra.mxu0 %v1194
        %v1196 = vpop.f32.mrf.mxu0
        %v1197 = vadd.f32 %v1027, %v1196
        %v1198 = vand.u32 %v594, 4294901760
        %v1199 = vsub.f32 %v594, %v1198
        %1200 = vmatmul.f32.gmra.mxu0 %v1199
        %v1201 = vpop.f32.mrf.mxu0
        %v1202 = vadd.f32 %v1031, %v1201
        %v1203 = vand.u32 %v597, 4294901760
        %v1204 = vsub.f32 %v597, %v1203
        %1205 = vmatmul.f32.gmra.mxu0 %v1204
        %v1206 = vpop.f32.mrf.mxu0
        %v1207 = vadd.f32 %v1035, %v1206
        %v1208 = vand.u32 %v600, 4294901760
        %v1209 = vsub.f32 %v600, %v1208
        %1210 = vmatmul.f32.gmra.mxu0 %v1209
        %v1211 = vpop.f32.mrf.mxu0
        %v1212 = vand.u32 %v603, 4294901760
        %v1213 = vsub.f32 %v603, %v1212
        %1214 = vmatmul.f32.gmra.mxu0 %v1213
        %v1215 = vpop.f32.mrf.mxu0
        %v1216 = vand.u32 %v606, 4294901760
        %v1217 = vsub.f32 %v606, %v1216
        %1218 = vmatmul.f32.gmra.mxu0 %v1217
        %v1219 = vpop.f32.mrf.mxu0
        %v1220 = vand.u32 %v609, 4294901760
        %v1221 = vsub.f32 %v609, %v1220
        %1222 = vmatmul.f32.gmra.mxu0 %v1221
        %v1223 = vpop.f32.mrf.mxu0
        %v1224 = vand.u32 %v612, 4294901760
        %v1225 = vsub.f32 %v612, %v1224
        %1226 = vmatmul.f32.gmra.mxu0 %v1225
        %v1227 = vpop.f32.mrf.mxu0
        %v1228 = vand.u32 %v615, 4294901760
        %v1229 = vsub.f32 %v615, %v1228
        %1230 = vmatmul.f32.gmra.mxu0 %v1229
        %v1231 = vpop.f32.mrf.mxu0
        %v1232 = vand.u32 %v618, 4294901760
        %v1233 = vsub.f32 %v618, %v1232
        %1234 = vmatmul.f32.gmra.mxu0 %v1233
        %v1235 = vpop.f32.mrf.mxu0
        %1236 = vdwg.mxu0
        %1237 = vmatpush.msra.mxu0 0.0
        %1238 = vmatpush.msra.mxu0 0.0
        %1239 = vmatpush.msra.mxu0 0.0
        %1240 = vmatpush.msra.mxu0 0.0
        %1241 = vmatpush.msra.mxu0 0.0
        %1242 = vmatpush.msra.mxu0 0.0
        %1243 = vmatpush.msra.mxu0 0.0
        %1244 = vmatpush.msra.mxu0 0.0
        %v1245 = vand.u32 %v458, 4294901760
        %1246 = vmatpush.msra.mxu0 %v1245
        %v1247 = vand.u32 %v457, 4294901760
        %1248 = vmatpush.msra.mxu0 %v1247
        %v1249 = vand.u32 %v456, 4294901760
        %1250 = vmatpush.msra.mxu0 %v1249
        %v1251 = vand.u32 %v455, 4294901760
        %1252 = vmatpush.msra.mxu0 %v1251
        %v1253 = vand.u32 %v454, 4294901760
        %1254 = vmatpush.msra.mxu0 %v1253
        %v1255 = vand.u32 %v453, 4294901760
        %1256 = vmatpush.msra.mxu0 %v1255
        %v1257 = vand.u32 %v452, 4294901760
        %1258 = vmatpush.msra.mxu0 %v1257
        %v1259 = vand.u32 %v451, 4294901760
        %1260 = vmatpush.msra.mxu0 %v1259
        %v1261 = vand.u32 %v525, 4294901760
        %v1262 = vsub.f32 %v525, %v1261
        %v1263 = vand.u32 %v1262, 4294901760
        %1264 = vmatmul.f32.gmra.mxu0 %v1263
        %v1265 = vpop.f32.mrf.mxu0
        %v1266 = vadd.f32 %v1094, %v1265
        %v1267 = vand.u32 %v528, 4294901760
        %v1268 = vsub.f32 %v528, %v1267
        %v1269 = vand.u32 %v1268, 4294901760
        %1270 = vmatmul.f32.gmra.mxu0 %v1269
        %v1271 = vpop.f32.mrf.mxu0
        %v1272 = vadd.f32 %v1099, %v1271
        %v1273 = vand.u32 %v531, 4294901760
        %v1274 = vsub.f32 %v531, %v1273
        %v1275 = vand.u32 %v1274, 4294901760
        %1276 = vmatmul.f32.gmra.mxu0 %v1275
        %v1277 = vpop.f32.mrf.mxu0
        %v1278 = vadd.f32 %v1104, %v1277
        %v1279 = vand.u32 %v534, 4294901760
        %v1280 = vsub.f32 %v534, %v1279
        %v1281 = vand.u32 %v1280, 4294901760
        %1282 = vmatmul.f32.gmra.mxu0 %v1281
        %v1283 = vpop.f32.mrf.mxu0
        %v1284 = vadd.f32 %v1109, %v1283
        %v1285 = vand.u32 %v537, 4294901760
        %v1286 = vsub.f32 %v537, %v1285
        %v1287 = vand.u32 %v1286, 4294901760
        %1288 = vmatmul.f32.gmra.mxu0 %v1287
        %v1289 = vpop.f32.mrf.mxu0
        %v1290 = vadd.f32 %v1114, %v1289
        %v1291 = vand.u32 %v540, 4294901760
        %v1292 = vsub.f32 %v540, %v1291
        %v1293 = vand.u32 %v1292, 4294901760
        %1294 = vmatmul.f32.gmra.mxu0 %v1293
        %v1295 = vpop.f32.mrf.mxu0
        %v1296 = vadd.f32 %v1119, %v1295
        %v1297 = vand.u32 %v543, 4294901760
        %v1298 = vsub.f32 %v543, %v1297
        %v1299 = vand.u32 %v1298, 4294901760
        %1300 = vmatmul.f32.gmra.mxu0 %v1299
        %v1301 = vpop.f32.mrf.mxu0
        %v1302 = vadd.f32 %v1124, %v1301
        %v1303 = vand.u32 %v546, 4294901760
        %v1304 = vsub.f32 %v546, %v1303
        %v1305 = vand.u32 %v1304, 4294901760
        %1306 = vmatmul.f32.gmra.mxu0 %v1305
        %v1307 = vpop.f32.mrf.mxu0
        %v1308 = vadd.f32 %v1129, %v1307
        %v1309 = vand.u32 %v549, 4294901760
        %v1310 = vsub.f32 %v549, %v1309
        %v1311 = vand.u32 %v1310, 4294901760
        %1312 = vmatmul.f32.gmra.mxu0 %v1311
        %v1313 = vpop.f32.mrf.mxu0
        %v1314 = vadd.f32 %v1134, %v1313
        %v1315 = vand.u32 %v552, 4294901760
        %v1316 = vsub.f32 %v552, %v1315
        %v1317 = vand.u32 %v1316, 4294901760
        %1318 = vmatmul.f32.gmra.mxu0 %v1317
        %v1319 = vpop.f32.mrf.mxu0
        %v1320 = vand.u32 %v555, 4294901760
        %v1321 = vsub.f32 %v555, %v1320
        %v1322 = vand.u32 %v1321, 4294901760
        %1323 = vmatmul.f32.gmra.mxu0 %v1322
        %v1324 = vpop.f32.mrf.mxu0
        %v1325 = vand.u32 %v558, 4294901760
        %v1326 = vsub.f32 %v558, %v1325
        %v1327 = vand.u32 %v1326, 4294901760
        %1328 = vmatmul.f32.gmra.mxu0 %v1327
        %v1329 = vpop.f32.mrf.mxu0
        %v1330 = vand.u32 %v561, 4294901760
        %v1331 = vsub.f32 %v561, %v1330
        %v1332 = vand.u32 %v1331, 4294901760
        %1333 = vmatmul.f32.gmra.mxu0 %v1332
        %v1334 = vpop.f32.mrf.mxu0
        %v1335 = vand.u32 %v564, 4294901760
        %v1336 = vsub.f32 %v564, %v1335
        %v1337 = vand.u32 %v1336, 4294901760
        %1338 = vmatmul.f32.gmra.mxu0 %v1337
        %v1339 = vpop.f32.mrf.mxu0
        %v1340 = vand.u32 %v567, 4294901760
        %v1341 = vsub.f32 %v567, %v1340
        %v1342 = vand.u32 %v1341, 4294901760
        %1343 = vmatmul.f32.gmra.mxu0 %v1342
        %v1344 = vpop.f32.mrf.mxu0
        %v1345 = vand.u32 %v570, 4294901760
        %v1346 = vsub.f32 %v570, %v1345
        %v1347 = vand.u32 %v1346, 4294901760
        %1348 = vmatmul.f32.gmra.mxu0 %v1347
        %v1349 = vpop.f32.mrf.mxu0
        %v1350 = vand.u32 %v573, 4294901760
        %v1351 = vsub.f32 %v573, %v1350
        %v1352 = vand.u32 %v1351, 4294901760
        %1353 = vmatmul.f32.gmra.mxu0 %v1352
        %v1354 = vpop.f32.mrf.mxu0
        %v1355 = vadd.f32 %v1167, %v1354
        %v1356 = vand.u32 %v576, 4294901760
        %v1357 = vsub.f32 %v576, %v1356
        %v1358 = vand.u32 %v1357, 4294901760
        %1359 = vmatmul.f32.gmra.mxu0 %v1358
        %v1360 = vpop.f32.mrf.mxu0
        %v1361 = vadd.f32 %v1172, %v1360
        %v1362 = vand.u32 %v579, 4294901760
        %v1363 = vsub.f32 %v579, %v1362
        %v1364 = vand.u32 %v1363, 4294901760
        %1365 = vmatmul.f32.gmra.mxu0 %v1364
        %v1366 = vpop.f32.mrf.mxu0
        %v1367 = vadd.f32 %v1177, %v1366
        %v1368 = vand.u32 %v582, 4294901760
        %v1369 = vsub.f32 %v582, %v1368
        %v1370 = vand.u32 %v1369, 4294901760
        %1371 = vmatmul.f32.gmra.mxu0 %v1370
        %v1372 = vpop.f32.mrf.mxu0
        %v1373 = vadd.f32 %v1182, %v1372
        %v1374 = vand.u32 %v585, 4294901760
        %v1375 = vsub.f32 %v585, %v1374
        %v1376 = vand.u32 %v1375, 4294901760
        %1377 = vmatmul.f32.gmra.mxu0 %v1376
        %v1378 = vpop.f32.mrf.mxu0
        %v1379 = vadd.f32 %v1187, %v1378
        %v1380 = vand.u32 %v588, 4294901760
        %v1381 = vsub.f32 %v588, %v1380
        %v1382 = vand.u32 %v1381, 4294901760
        %1383 = vmatmul.f32.gmra.mxu0 %v1382
        %v1384 = vpop.f32.mrf.mxu0
        %v1385 = vadd.f32 %v1192, %v1384
        %v1386 = vand.u32 %v591, 4294901760
        %v1387 = vsub.f32 %v591, %v1386
        %v1388 = vand.u32 %v1387, 4294901760
        %1389 = vmatmul.f32.gmra.mxu0 %v1388
        %v1390 = vpop.f32.mrf.mxu0
        %v1391 = vadd.f32 %v1197, %v1390
        %v1392 = vand.u32 %v594, 4294901760
        %v1393 = vsub.f32 %v594, %v1392
        %v1394 = vand.u32 %v1393, 4294901760
        %1395 = vmatmul.f32.gmra.mxu0 %v1394
        %v1396 = vpop.f32.mrf.mxu0
        %v1397 = vadd.f32 %v1202, %v1396
        %v1398 = vand.u32 %v597, 4294901760
        %v1399 = vsub.f32 %v597, %v1398
        %v1400 = vand.u32 %v1399, 4294901760
        %1401 = vmatmul.f32.gmra.mxu0 %v1400
        %v1402 = vpop.f32.mrf.mxu0
        %v1403 = vadd.f32 %v1207, %v1402
        %v1404 = vand.u32 %v600, 4294901760
        %v1405 = vsub.f32 %v600, %v1404
        %v1406 = vand.u32 %v1405, 4294901760
        %1407 = vmatmul.f32.gmra.mxu0 %v1406
        %v1408 = vpop.f32.mrf.mxu0
        %v1409 = vand.u32 %v603, 4294901760
        %v1410 = vsub.f32 %v603, %v1409
        %v1411 = vand.u32 %v1410, 4294901760
        %1412 = vmatmul.f32.gmra.mxu0 %v1411
        %v1413 = vpop.f32.mrf.mxu0
        %v1414 = vand.u32 %v606, 4294901760
        %v1415 = vsub.f32 %v606, %v1414
        %v1416 = vand.u32 %v1415, 4294901760
        %1417 = vmatmul.f32.gmra.mxu0 %v1416
        %v1418 = vpop.f32.mrf.mxu0
        %v1419 = vand.u32 %v609, 4294901760
        %v1420 = vsub.f32 %v609, %v1419
        %v1421 = vand.u32 %v1420, 4294901760
        %1422 = vmatmul.f32.gmra.mxu0 %v1421
        %v1423 = vpop.f32.mrf.mxu0
        %v1424 = vand.u32 %v612, 4294901760
        %v1425 = vsub.f32 %v612, %v1424
        %v1426 = vand.u32 %v1425, 4294901760
        %1427 = vmatmul.f32.gmra.mxu0 %v1426
        %v1428 = vpop.f32.mrf.mxu0
        %v1429 = vand.u32 %v615, 4294901760
        %v1430 = vsub.f32 %v615, %v1429
        %v1431 = vand.u32 %v1430, 4294901760
        %1432 = vmatmul.f32.gmra.mxu0 %v1431
        %v1433 = vpop.f32.mrf.mxu0
        %v1434 = vand.u32 %v618, 4294901760
        %v1435 = vsub.f32 %v618, %v1434
        %v1436 = vand.u32 %v1435, 4294901760
        %1437 = vmatmul.f32.gmra.mxu0 %v1436
        %v1438 = vpop.f32.mrf.mxu0
        %1439 = vdwg.mxu0
        %1440 = vmatpush.msra.mxu0 0.0
        %1441 = vmatpush.msra.mxu0 0.0
        %1442 = vmatpush.msra.mxu0 0.0
        %1443 = vmatpush.msra.mxu0 0.0
        %1444 = vmatpush.msra.mxu0 0.0
        %1445 = vmatpush.msra.mxu0 0.0
        %1446 = vmatpush.msra.mxu0 0.0
        %1447 = vmatpush.msra.mxu0 0.0
        %v1448 = vand.u32 %v458, 4294901760
        %v1449 = vsub.f32 %v458, %v1448
        %v1450 = vand.u32 %v1449, 4294901760
        %1451 = vmatpush.msra.mxu0 %v1450
        %v1452 = vand.u32 %v457, 4294901760
        %v1453 = vsub.f32 %v457, %v1452
        %v1454 = vand.u32 %v1453, 4294901760
        %1455 = vmatpush.msra.mxu0 %v1454
        %v1456 = vand.u32 %v456, 4294901760
        %v1457 = vsub.f32 %v456, %v1456
        %v1458 = vand.u32 %v1457, 4294901760
        %1459 = vmatpush.msra.mxu0 %v1458
        %v1460 = vand.u32 %v455, 4294901760
        %v1461 = vsub.f32 %v455, %v1460
        %v1462 = vand.u32 %v1461, 4294901760
        %1463 = vmatpush.msra.mxu0 %v1462
        %v1464 = vand.u32 %v454, 4294901760
        %v1465 = vsub.f32 %v454, %v1464
        %v1466 = vand.u32 %v1465, 4294901760
        %1467 = vmatpush.msra.mxu0 %v1466
        %v1468 = vand.u32 %v453, 4294901760
        %v1469 = vsub.f32 %v453, %v1468
        %v1470 = vand.u32 %v1469, 4294901760
        %1471 = vmatpush.msra.mxu0 %v1470
        %v1472 = vand.u32 %v452, 4294901760
        %v1473 = vsub.f32 %v452, %v1472
        %v1474 = vand.u32 %v1473, 4294901760
        %1475 = vmatpush.msra.mxu0 %v1474
        %v1476 = vand.u32 %v451, 4294901760
        %v1477 = vsub.f32 %v451, %v1476
        %v1478 = vand.u32 %v1477, 4294901760
        %1479 = vmatpush.msra.mxu0 %v1478
        %v1480 = vand.u32 %v525, 4294901760
        %1481 = vmatmul.f32.gmra.mxu0 %v1480
        %v1482 = vpop.f32.mrf.mxu0
        %v1483 = vadd.f32 %v1266, %v1482
        %v1484 = vand.u32 %v528, 4294901760
        %1485 = vmatmul.f32.gmra.mxu0 %v1484
        %v1486 = vpop.f32.mrf.mxu0
        %v1487 = vadd.f32 %v1272, %v1486
        %v1488 = vand.u32 %v531, 4294901760
        %1489 = vmatmul.f32.gmra.mxu0 %v1488
        %v1490 = vpop.f32.mrf.mxu0
        %v1491 = vadd.f32 %v1278, %v1490
        %v1492 = vand.u32 %v534, 4294901760
        %1493 = vmatmul.f32.gmra.mxu0 %v1492
        %v1494 = vpop.f32.mrf.mxu0
        %v1495 = vadd.f32 %v1284, %v1494
        %v1496 = vand.u32 %v537, 4294901760
        %1497 = vmatmul.f32.gmra.mxu0 %v1496
        %v1498 = vpop.f32.mrf.mxu0
        %v1499 = vadd.f32 %v1290, %v1498
        %v1500 = vand.u32 %v540, 4294901760
        %1501 = vmatmul.f32.gmra.mxu0 %v1500
        %v1502 = vpop.f32.mrf.mxu0
        %v1503 = vadd.f32 %v1296, %v1502
        %v1504 = vand.u32 %v543, 4294901760
        %1505 = vmatmul.f32.gmra.mxu0 %v1504
        %v1506 = vpop.f32.mrf.mxu0
        %v1507 = vadd.f32 %v1302, %v1506
        %v1508 = vand.u32 %v546, 4294901760
        %1509 = vmatmul.f32.gmra.mxu0 %v1508
        %v1510 = vpop.f32.mrf.mxu0
        %v1511 = vadd.f32 %v1308, %v1510
        %v1512 = vand.u32 %v549, 4294901760
        %1513 = vmatmul.f32.gmra.mxu0 %v1512
        %v1514 = vpop.f32.mrf.mxu0
        %v1515 = vadd.f32 %v1314, %v1514
        %v1516 = vand.u32 %v552, 4294901760
        %1517 = vmatmul.f32.gmra.mxu0 %v1516
        %v1518 = vpop.f32.mrf.mxu0
        %v1519 = vand.u32 %v555, 4294901760
        %1520 = vmatmul.f32.gmra.mxu0 %v1519
        %v1521 = vpop.f32.mrf.mxu0
        %v1522 = vand.u32 %v558, 4294901760
        %1523 = vmatmul.f32.gmra.mxu0 %v1522
        %v1524 = vpop.f32.mrf.mxu0
        %v1525 = vand.u32 %v561, 4294901760
        %1526 = vmatmul.f32.gmra.mxu0 %v1525
        %v1527 = vpop.f32.mrf.mxu0
        %v1528 = vand.u32 %v564, 4294901760
        %1529 = vmatmul.f32.gmra.mxu0 %v1528
        %v1530 = vpop.f32.mrf.mxu0
        %v1531 = vand.u32 %v567, 4294901760
        %1532 = vmatmul.f32.gmra.mxu0 %v1531
        %v1533 = vpop.f32.mrf.mxu0
        %v1534 = vand.u32 %v570, 4294901760
        %1535 = vmatmul.f32.gmra.mxu0 %v1534
        %v1536 = vpop.f32.mrf.mxu0
        %v1537 = vand.u32 %v573, 4294901760
        %1538 = vmatmul.f32.gmra.mxu0 %v1537
        %v1539 = vpop.f32.mrf.mxu0
        %v1540 = vadd.f32 %v1355, %v1539
        %v1541 = vand.u32 %v576, 4294901760
        %1542 = vmatmul.f32.gmra.mxu0 %v1541
        %v1543 = vpop.f32.mrf.mxu0
        %v1544 = vadd.f32 %v1361, %v1543
        %v1545 = vand.u32 %v579, 4294901760
        %1546 = vmatmul.f32.gmra.mxu0 %v1545
        %v1547 = vpop.f32.mrf.mxu0
        %v1548 = vadd.f32 %v1367, %v1547
        %v1549 = vand.u32 %v582, 4294901760
        %1550 = vmatmul.f32.gmra.mxu0 %v1549
        %v1551 = vpop.f32.mrf.mxu0
        %v1552 = vadd.f32 %v1373, %v1551
        %v1553 = vand.u32 %v585, 4294901760
        %1554 = vmatmul.f32.gmra.mxu0 %v1553
        %v1555 = vpop.f32.mrf.mxu0
        %v1556 = vadd.f32 %v1379, %v1555
        %v1557 = vand.u32 %v588, 4294901760
        %1558 = vmatmul.f32.gmra.mxu0 %v1557
        %v1559 = vpop.f32.mrf.mxu0
        %v1560 = vadd.f32 %v1385, %v1559
        %v1561 = vand.u32 %v591, 4294901760
        %1562 = vmatmul.f32.gmra.mxu0 %v1561
        %v1563 = vpop.f32.mrf.mxu0
        %v1564 = vadd.f32 %v1391, %v1563
        %v1565 = vand.u32 %v594, 4294901760
        %1566 = vmatmul.f32.gmra.mxu0 %v1565
        %v1567 = vpop.f32.mrf.mxu0
        %v1568 = vadd.f32 %v1397, %v1567
        %v1569 = vand.u32 %v597, 4294901760
        %1570 = vmatmul.f32.gmra.mxu0 %v1569
        %v1571 = vpop.f32.mrf.mxu0
        %v1572 = vadd.f32 %v1403, %v1571
        %v1573 = vand.u32 %v600, 4294901760
        %1574 = vmatmul.f32.gmra.mxu0 %v1573
        %v1575 = vpop.f32.mrf.mxu0
        %v1576 = vand.u32 %v603, 4294901760
        %1577 = vmatmul.f32.gmra.mxu0 %v1576
        %v1578 = vpop.f32.mrf.mxu0
        %v1579 = vand.u32 %v606, 4294901760
        %1580 = vmatmul.f32.gmra.mxu0 %v1579
        %v1581 = vpop.f32.mrf.mxu0
        %v1582 = vand.u32 %v609, 4294901760
        %1583 = vmatmul.f32.gmra.mxu0 %v1582
        %v1584 = vpop.f32.mrf.mxu0
        %v1585 = vand.u32 %v612, 4294901760
        %1586 = vmatmul.f32.gmra.mxu0 %v1585
        %v1587 = vpop.f32.mrf.mxu0
        %v1588 = vand.u32 %v615, 4294901760
        %1589 = vmatmul.f32.gmra.mxu0 %v1588
        %v1590 = vpop.f32.mrf.mxu0
        %v1591 = vand.u32 %v618, 4294901760
        %1592 = vmatmul.f32.gmra.mxu0 %v1591
        %v1593 = vpop.f32.mrf.mxu0
        %1594 = vdwg.mxu0
        %1595 = vmatpush.msra.mxu0 0.0
        %1596 = vmatpush.msra.mxu0 0.0
        %1597 = vmatpush.msra.mxu0 0.0
        %1598 = vmatpush.msra.mxu0 0.0
        %1599 = vmatpush.msra.mxu0 0.0
        %1600 = vmatpush.msra.mxu0 0.0
        %1601 = vmatpush.msra.mxu0 0.0
        %1602 = vmatpush.msra.mxu0 0.0
        %v1603 = vand.u32 %v458, 4294901760
        %1604 = vmatpush.msra.mxu0 %v1603
        %v1605 = vand.u32 %v457, 4294901760
        %1606 = vmatpush.msra.mxu0 %v1605
        %v1607 = vand.u32 %v456, 4294901760
        %1608 = vmatpush.msra.mxu0 %v1607
        %v1609 = vand.u32 %v455, 4294901760
        %1610 = vmatpush.msra.mxu0 %v1609
        %v1611 = vand.u32 %v454, 4294901760
        %1612 = vmatpush.msra.mxu0 %v1611
        %v1613 = vand.u32 %v453, 4294901760
        %1614 = vmatpush.msra.mxu0 %v1613
        %v1615 = vand.u32 %v452, 4294901760
        %1616 = vmatpush.msra.mxu0 %v1615
        %v1617 = vand.u32 %v451, 4294901760
        %1618 = vmatpush.msra.mxu0 %v1617
        %v1619 = vand.u32 %v525, 4294901760
        %1620 = vmatmul.f32.gmra.mxu0 %v1619
        %v1621 = vpop.f32.mrf.mxu0
        %v1622 = vadd.f32 %v1483, %v1621
        %v1623 = vand.u32 %v528, 4294901760
        %1624 = vmatmul.f32.gmra.mxu0 %v1623
        %v1625 = vpop.f32.mrf.mxu0
        %v1626 = vadd.f32 %v1487, %v1625
        %v1627 = vand.u32 %v531, 4294901760
        %1628 = vmatmul.f32.gmra.mxu0 %v1627
        %v1629 = vpop.f32.mrf.mxu0
        %v1630 = vadd.f32 %v1491, %v1629
        %v1631 = vand.u32 %v534, 4294901760
        %1632 = vmatmul.f32.gmra.mxu0 %v1631
        %v1633 = vpop.f32.mrf.mxu0
        %v1634 = vadd.f32 %v1495, %v1633
        %v1635 = vand.u32 %v537, 4294901760
        %1636 = vmatmul.f32.gmra.mxu0 %v1635
        %v1637 = vpop.f32.mrf.mxu0
        %v1638 = vadd.f32 %v1499, %v1637
        %v1639 = vand.u32 %v540, 4294901760
        %1640 = vmatmul.f32.gmra.mxu0 %v1639
        %v1641 = vpop.f32.mrf.mxu0
        %v1642 = vadd.f32 %v1503, %v1641
        %v1643 = vand.u32 %v543, 4294901760
        %1644 = vmatmul.f32.gmra.mxu0 %v1643
        %v1645 = vpop.f32.mrf.mxu0
        %v1646 = vadd.f32 %v1507, %v1645
        %v1647 = vand.u32 %v546, 4294901760
        %1648 = vmatmul.f32.gmra.mxu0 %v1647
        %v1649 = vpop.f32.mrf.mxu0
        %v1650 = vadd.f32 %v1511, %v1649
        %v1651 = vand.u32 %v549, 4294901760
        %1652 = vmatmul.f32.gmra.mxu0 %v1651
        %v1653 = vpop.f32.mrf.mxu0
        %v1654 = vadd.f32 %v1515, %v1653
        %v1655 = vand.u32 %v552, 4294901760
        %1656 = vmatmul.f32.gmra.mxu0 %v1655
        %v1657 = vpop.f32.mrf.mxu0
        %v1658 = vand.u32 %v555, 4294901760
        %1659 = vmatmul.f32.gmra.mxu0 %v1658
        %v1660 = vpop.f32.mrf.mxu0
        %v1661 = vand.u32 %v558, 4294901760
        %1662 = vmatmul.f32.gmra.mxu0 %v1661
        %v1663 = vpop.f32.mrf.mxu0
        %v1664 = vand.u32 %v561, 4294901760
        %1665 = vmatmul.f32.gmra.mxu0 %v1664
        %v1666 = vpop.f32.mrf.mxu0
        %v1667 = vand.u32 %v564, 4294901760
        %1668 = vmatmul.f32.gmra.mxu0 %v1667
        %v1669 = vpop.f32.mrf.mxu0
        %v1670 = vand.u32 %v567, 4294901760
        %1671 = vmatmul.f32.gmra.mxu0 %v1670
        %v1672 = vpop.f32.mrf.mxu0
        %v1673 = vand.u32 %v570, 4294901760
        %1674 = vmatmul.f32.gmra.mxu0 %v1673
        %v1675 = vpop.f32.mrf.mxu0
        %v1676 = vand.u32 %v573, 4294901760
        %1677 = vmatmul.f32.gmra.mxu0 %v1676
        %v1678 = vpop.f32.mrf.mxu0
        %v1679 = vadd.f32 %v1540, %v1678
        %v1680 = vand.u32 %v576, 4294901760
        %1681 = vmatmul.f32.gmra.mxu0 %v1680
        %v1682 = vpop.f32.mrf.mxu0
        %v1683 = vadd.f32 %v1544, %v1682
        %v1684 = vand.u32 %v579, 4294901760
        %1685 = vmatmul.f32.gmra.mxu0 %v1684
        %v1686 = vpop.f32.mrf.mxu0
        %v1687 = vadd.f32 %v1548, %v1686
        %v1688 = vand.u32 %v582, 4294901760
        %1689 = vmatmul.f32.gmra.mxu0 %v1688
        %v1690 = vpop.f32.mrf.mxu0
        %v1691 = vadd.f32 %v1552, %v1690
        %v1692 = vand.u32 %v585, 4294901760
        %1693 = vmatmul.f32.gmra.mxu0 %v1692
        %v1694 = vpop.f32.mrf.mxu0
        %v1695 = vadd.f32 %v1556, %v1694
        %v1696 = vand.u32 %v588, 4294901760
        %1697 = vmatmul.f32.gmra.mxu0 %v1696
        %v1698 = vpop.f32.mrf.mxu0
        %v1699 = vadd.f32 %v1560, %v1698
        %v1700 = vand.u32 %v591, 4294901760
        %1701 = vmatmul.f32.gmra.mxu0 %v1700
        %v1702 = vpop.f32.mrf.mxu0
        %v1703 = vadd.f32 %v1564, %v1702
        %v1704 = vand.u32 %v594, 4294901760
        %1705 = vmatmul.f32.gmra.mxu0 %v1704
        %v1706 = vpop.f32.mrf.mxu0
        %v1707 = vadd.f32 %v1568, %v1706
        %v1708 = vand.u32 %v597, 4294901760
        %1709 = vmatmul.f32.gmra.mxu0 %v1708
        %v1710 = vpop.f32.mrf.mxu0
        %v1711 = vadd.f32 %v1572, %v1710
        %v1712 = vand.u32 %v600, 4294901760
        %1713 = vmatmul.f32.gmra.mxu0 %v1712
        %v1714 = vpop.f32.mrf.mxu0
        %v1715 = vand.u32 %v603, 4294901760
        %1716 = vmatmul.f32.gmra.mxu0 %v1715
        %v1717 = vpop.f32.mrf.mxu0
        %v1718 = vand.u32 %v606, 4294901760
        %1719 = vmatmul.f32.gmra.mxu0 %v1718
        %v1720 = vpop.f32.mrf.mxu0
        %v1721 = vand.u32 %v609, 4294901760
        %1722 = vmatmul.f32.gmra.mxu0 %v1721
        %v1723 = vpop.f32.mrf.mxu0
        %v1724 = vand.u32 %v612, 4294901760
        %1725 = vmatmul.f32.gmra.mxu0 %v1724
        %v1726 = vpop.f32.mrf.mxu0
        %v1727 = vand.u32 %v615, 4294901760
        %1728 = vmatmul.f32.gmra.mxu0 %v1727
        %v1729 = vpop.f32.mrf.mxu0
        %v1730 = vand.u32 %v618, 4294901760
        %1731 = vmatmul.f32.gmra.mxu0 %v1730
        %v1732 = vpop.f32.mrf.mxu0
        %1733 = vdwg.mxu0
        %v1735 = vsel %vm523, %v459, 0
        %v1738 = vsel %vm523, %v460, 0
        %v1741 = vsel %vm523, %v461, 0
        %v1744 = vsel %vm523, %v462, 0
        %v1747 = vsel %vm523, %v463, 0
        %v1750 = vsel %vm523, %v464, 0
        %v1753 = vsel %vm523, %v465, 0
        %v1756 = vsel %vm523, %v466, 0
        %v1759 = vsel %vm523, %v467, 0
        %v1762 = vsel %vm523, %v468, 0
        %v1765 = vsel %vm523, %v469, 0
        %v1768 = vsel %vm523, %v470, 0
        %v1771 = vsel %vm523, %v471, 0
        %v1774 = vsel %vm523, %v472, 0
        %v1777 = vsel %vm523, %v473, 0
        %v1780 = vsel %vm523, %v474, 0
        %v1783 = vsel %vm523, %v475, 0
        %v1786 = vsel %vm523, %v476, 0
        %v1789 = vsel %vm523, %v477, 0
        %v1792 = vsel %vm523, %v478, 0
        %v1795 = vsel %vm523, %v479, 0
        %v1798 = vsel %vm523, %v480, 0
        %v1801 = vsel %vm523, %v481, 0
        %v1804 = vsel %vm523, %v482, 0
        %v1807 = vsel %vm523, %v483, 0
        %v1810 = vsel %vm523, %v484, 0
        %v1813 = vsel %vm523, %v485, 0
        %v1816 = vsel %vm523, %v486, 0
        %v1819 = vsel %vm523, %v487, 0
        %v1822 = vsel %vm523, %v488, 0
        %v1825 = vsel %vm523, %v489, 0
        %v1828 = vsel %vm523, %v490, 0
        %1830 = vmatpush.msra.mxu0 0.0
        %1831 = vmatpush.msra.mxu0 0.0
        %1832 = vmatpush.msra.mxu0 0.0
        %1833 = vmatpush.msra.mxu0 0.0
        %1834 = vmatpush.msra.mxu0 0.0
        %1835 = vmatpush.msra.mxu0 0.0
        %1836 = vmatpush.msra.mxu0 0.0
        %1837 = vmatpush.msra.mxu0 0.0
        %v1838 = vand.u32 %v383, 4294901760
        %1839 = vmatpush.msra.mxu0 %v1838
        %v1840 = vand.u32 %v382, 4294901760
        %1841 = vmatpush.msra.mxu0 %v1840
        %v1842 = vand.u32 %v381, 4294901760
        %1843 = vmatpush.msra.mxu0 %v1842
        %v1844 = vand.u32 %v380, 4294901760
        %1845 = vmatpush.msra.mxu0 %v1844
        %v1846 = vand.u32 %v379, 4294901760
        %1847 = vmatpush.msra.mxu0 %v1846
        %v1848 = vand.u32 %v378, 4294901760
        %1849 = vmatpush.msra.mxu0 %v1848
        %v1850 = vand.u32 %v377, 4294901760
        %1851 = vmatpush.msra.mxu0 %v1850
        %v1852 = vand.u32 %v376, 4294901760
        %1853 = vmatpush.msra.mxu0 %v1852
        %v1854 = vand.u32 %v1735, 4294901760
        %v1855 = vsub.f32 %v1735, %v1854
        %v1856 = vand.u32 %v1855, 4294901760
        %v1857 = vsub.f32 %v1855, %v1856
        %v1858 = vand.u32 %v1857, 4294901760
        %1859 = vmatmul.f32.gmra.mxu0 %v1858
        %v1860 = vpop.f32.mrf.mxu0
        %v1861 = vadd.f32 %v1622, %v1860
        %v1862 = vand.u32 %v1738, 4294901760
        %v1863 = vsub.f32 %v1738, %v1862
        %v1864 = vand.u32 %v1863, 4294901760
        %v1865 = vsub.f32 %v1863, %v1864
        %v1866 = vand.u32 %v1865, 4294901760
        %1867 = vmatmul.f32.gmra.mxu0 %v1866
        %v1868 = vpop.f32.mrf.mxu0
        %v1869 = vadd.f32 %v1626, %v1868
        %v1870 = vand.u32 %v1741, 4294901760
        %v1871 = vsub.f32 %v1741, %v1870
        %v1872 = vand.u32 %v1871, 4294901760
        %v1873 = vsub.f32 %v1871, %v1872
        %v1874 = vand.u32 %v1873, 4294901760
        %1875 = vmatmul.f32.gmra.mxu0 %v1874
        %v1876 = vpop.f32.mrf.mxu0
        %v1877 = vadd.f32 %v1630, %v1876
        %v1878 = vand.u32 %v1744, 4294901760
        %v1879 = vsub.f32 %v1744, %v1878
        %v1880 = vand.u32 %v1879, 4294901760
        %v1881 = vsub.f32 %v1879, %v1880
        %v1882 = vand.u32 %v1881, 4294901760
        %1883 = vmatmul.f32.gmra.mxu0 %v1882
        %v1884 = vpop.f32.mrf.mxu0
        %v1885 = vadd.f32 %v1634, %v1884
        %v1886 = vand.u32 %v1747, 4294901760
        %v1887 = vsub.f32 %v1747, %v1886
        %v1888 = vand.u32 %v1887, 4294901760
        %v1889 = vsub.f32 %v1887, %v1888
        %v1890 = vand.u32 %v1889, 4294901760
        %1891 = vmatmul.f32.gmra.mxu0 %v1890
        %v1892 = vpop.f32.mrf.mxu0
        %v1893 = vadd.f32 %v1638, %v1892
        %v1894 = vand.u32 %v1750, 4294901760
        %v1895 = vsub.f32 %v1750, %v1894
        %v1896 = vand.u32 %v1895, 4294901760
        %v1897 = vsub.f32 %v1895, %v1896
        %v1898 = vand.u32 %v1897, 4294901760
        %1899 = vmatmul.f32.gmra.mxu0 %v1898
        %v1900 = vpop.f32.mrf.mxu0
        %v1901 = vadd.f32 %v1642, %v1900
        %v1902 = vand.u32 %v1753, 4294901760
        %v1903 = vsub.f32 %v1753, %v1902
        %v1904 = vand.u32 %v1903, 4294901760
        %v1905 = vsub.f32 %v1903, %v1904
        %v1906 = vand.u32 %v1905, 4294901760
        %1907 = vmatmul.f32.gmra.mxu0 %v1906
        %v1908 = vpop.f32.mrf.mxu0
        %v1909 = vadd.f32 %v1646, %v1908
        %v1910 = vand.u32 %v1756, 4294901760
        %v1911 = vsub.f32 %v1756, %v1910
        %v1912 = vand.u32 %v1911, 4294901760
        %v1913 = vsub.f32 %v1911, %v1912
        %v1914 = vand.u32 %v1913, 4294901760
        %1915 = vmatmul.f32.gmra.mxu0 %v1914
        %v1916 = vpop.f32.mrf.mxu0
        %v1917 = vadd.f32 %v1650, %v1916
        %v1918 = vand.u32 %v1759, 4294901760
        %v1919 = vsub.f32 %v1759, %v1918
        %v1920 = vand.u32 %v1919, 4294901760
        %v1921 = vsub.f32 %v1919, %v1920
        %v1922 = vand.u32 %v1921, 4294901760
        %1923 = vmatmul.f32.gmra.mxu0 %v1922
        %v1924 = vpop.f32.mrf.mxu0
        %v1925 = vadd.f32 %v1654, %v1924
        %v1926 = vand.u32 %v1762, 4294901760
        %v1927 = vsub.f32 %v1762, %v1926
        %v1928 = vand.u32 %v1927, 4294901760
        %v1929 = vsub.f32 %v1927, %v1928
        %v1930 = vand.u32 %v1929, 4294901760
        %1931 = vmatmul.f32.gmra.mxu0 %v1930
        %v1932 = vpop.f32.mrf.mxu0
        %v1933 = vand.u32 %v1765, 4294901760
        %v1934 = vsub.f32 %v1765, %v1933
        %v1935 = vand.u32 %v1934, 4294901760
        %v1936 = vsub.f32 %v1934, %v1935
        %v1937 = vand.u32 %v1936, 4294901760
        %1938 = vmatmul.f32.gmra.mxu0 %v1937
        %v1939 = vpop.f32.mrf.mxu0
        %v1940 = vand.u32 %v1768, 4294901760
        %v1941 = vsub.f32 %v1768, %v1940
        %v1942 = vand.u32 %v1941, 4294901760
        %v1943 = vsub.f32 %v1941, %v1942
        %v1944 = vand.u32 %v1943, 4294901760
        %1945 = vmatmul.f32.gmra.mxu0 %v1944
        %v1946 = vpop.f32.mrf.mxu0
        %v1947 = vand.u32 %v1771, 4294901760
        %v1948 = vsub.f32 %v1771, %v1947
        %v1949 = vand.u32 %v1948, 4294901760
        %v1950 = vsub.f32 %v1948, %v1949
        %v1951 = vand.u32 %v1950, 4294901760
        %1952 = vmatmul.f32.gmra.mxu0 %v1951
        %v1953 = vpop.f32.mrf.mxu0
        %v1954 = vand.u32 %v1774, 4294901760
        %v1955 = vsub.f32 %v1774, %v1954
        %v1956 = vand.u32 %v1955, 4294901760
        %v1957 = vsub.f32 %v1955, %v1956
        %v1958 = vand.u32 %v1957, 4294901760
        %1959 = vmatmul.f32.gmra.mxu0 %v1958
        %v1960 = vpop.f32.mrf.mxu0
        %v1961 = vand.u32 %v1777, 4294901760
        %v1962 = vsub.f32 %v1777, %v1961
        %v1963 = vand.u32 %v1962, 4294901760
        %v1964 = vsub.f32 %v1962, %v1963
        %v1965 = vand.u32 %v1964, 4294901760
        %1966 = vmatmul.f32.gmra.mxu0 %v1965
        %v1967 = vpop.f32.mrf.mxu0
        %v1968 = vand.u32 %v1780, 4294901760
        %v1969 = vsub.f32 %v1780, %v1968
        %v1970 = vand.u32 %v1969, 4294901760
        %v1971 = vsub.f32 %v1969, %v1970
        %v1972 = vand.u32 %v1971, 4294901760
        %1973 = vmatmul.f32.gmra.mxu0 %v1972
        %v1974 = vpop.f32.mrf.mxu0
        %v1975 = vand.u32 %v1783, 4294901760
        %v1976 = vsub.f32 %v1783, %v1975
        %v1977 = vand.u32 %v1976, 4294901760
        %v1978 = vsub.f32 %v1976, %v1977
        %v1979 = vand.u32 %v1978, 4294901760
        %1980 = vmatmul.f32.gmra.mxu0 %v1979
        %v1981 = vpop.f32.mrf.mxu0
        %v1982 = vadd.f32 %v1679, %v1981
        %v1983 = vand.u32 %v1786, 4294901760
        %v1984 = vsub.f32 %v1786, %v1983
        %v1985 = vand.u32 %v1984, 4294901760
        %v1986 = vsub.f32 %v1984, %v1985
        %v1987 = vand.u32 %v1986, 4294901760
        %1988 = vmatmul.f32.gmra.mxu0 %v1987
        %v1989 = vpop.f32.mrf.mxu0
        %v1990 = vadd.f32 %v1683, %v1989
        %v1991 = vand.u32 %v1789, 4294901760
        %v1992 = vsub.f32 %v1789, %v1991
        %v1993 = vand.u32 %v1992, 4294901760
        %v1994 = vsub.f32 %v1992, %v1993
        %v1995 = vand.u32 %v1994, 4294901760
        %1996 = vmatmul.f32.gmra.mxu0 %v1995
        %v1997 = vpop.f32.mrf.mxu0
        %v1998 = vadd.f32 %v1687, %v1997
        %v1999 = vand.u32 %v1792, 4294901760
        %v2000 = vsub.f32 %v1792, %v1999
        %v2001 = vand.u32 %v2000, 4294901760
        %v2002 = vsub.f32 %v2000, %v2001
        %v2003 = vand.u32 %v2002, 4294901760
        %2004 = vmatmul.f32.gmra.mxu0 %v2003
        %v2005 = vpop.f32.mrf.mxu0
        %v2006 = vadd.f32 %v1691, %v2005
        %v2007 = vand.u32 %v1795, 4294901760
        %v2008 = vsub.f32 %v1795, %v2007
        %v2009 = vand.u32 %v2008, 4294901760
        %v2010 = vsub.f32 %v2008, %v2009
        %v2011 = vand.u32 %v2010, 4294901760
        %2012 = vmatmul.f32.gmra.mxu0 %v2011
        %v2013 = vpop.f32.mrf.mxu0
        %v2014 = vadd.f32 %v1695, %v2013
        %v2015 = vand.u32 %v1798, 4294901760
        %v2016 = vsub.f32 %v1798, %v2015
        %v2017 = vand.u32 %v2016, 4294901760
        %v2018 = vsub.f32 %v2016, %v2017
        %v2019 = vand.u32 %v2018, 4294901760
        %2020 = vmatmul.f32.gmra.mxu0 %v2019
        %v2021 = vpop.f32.mrf.mxu0
        %v2022 = vadd.f32 %v1699, %v2021
        %v2023 = vand.u32 %v1801, 4294901760
        %v2024 = vsub.f32 %v1801, %v2023
        %v2025 = vand.u32 %v2024, 4294901760
        %v2026 = vsub.f32 %v2024, %v2025
        %v2027 = vand.u32 %v2026, 4294901760
        %2028 = vmatmul.f32.gmra.mxu0 %v2027
        %v2029 = vpop.f32.mrf.mxu0
        %v2030 = vadd.f32 %v1703, %v2029
        %v2031 = vand.u32 %v1804, 4294901760
        %v2032 = vsub.f32 %v1804, %v2031
        %v2033 = vand.u32 %v2032, 4294901760
        %v2034 = vsub.f32 %v2032, %v2033
        %v2035 = vand.u32 %v2034, 4294901760
        %2036 = vmatmul.f32.gmra.mxu0 %v2035
        %v2037 = vpop.f32.mrf.mxu0
        %v2038 = vadd.f32 %v1707, %v2037
        %v2039 = vand.u32 %v1807, 4294901760
        %v2040 = vsub.f32 %v1807, %v2039
        %v2041 = vand.u32 %v2040, 4294901760
        %v2042 = vsub.f32 %v2040, %v2041
        %v2043 = vand.u32 %v2042, 4294901760
        %2044 = vmatmul.f32.gmra.mxu0 %v2043
        %v2045 = vpop.f32.mrf.mxu0
        %v2046 = vadd.f32 %v1711, %v2045
        %v2047 = vand.u32 %v1810, 4294901760
        %v2048 = vsub.f32 %v1810, %v2047
        %v2049 = vand.u32 %v2048, 4294901760
        %v2050 = vsub.f32 %v2048, %v2049
        %v2051 = vand.u32 %v2050, 4294901760
        %2052 = vmatmul.f32.gmra.mxu0 %v2051
        %v2053 = vpop.f32.mrf.mxu0
        %v2054 = vand.u32 %v1813, 4294901760
        %v2055 = vsub.f32 %v1813, %v2054
        %v2056 = vand.u32 %v2055, 4294901760
        %v2057 = vsub.f32 %v2055, %v2056
        %v2058 = vand.u32 %v2057, 4294901760
        %2059 = vmatmul.f32.gmra.mxu0 %v2058
        %v2060 = vpop.f32.mrf.mxu0
        %v2061 = vand.u32 %v1816, 4294901760
        %v2062 = vsub.f32 %v1816, %v2061
        %v2063 = vand.u32 %v2062, 4294901760
        %v2064 = vsub.f32 %v2062, %v2063
        %v2065 = vand.u32 %v2064, 4294901760
        %2066 = vmatmul.f32.gmra.mxu0 %v2065
        %v2067 = vpop.f32.mrf.mxu0
        %v2068 = vand.u32 %v1819, 4294901760
        %v2069 = vsub.f32 %v1819, %v2068
        %v2070 = vand.u32 %v2069, 4294901760
        %v2071 = vsub.f32 %v2069, %v2070
        %v2072 = vand.u32 %v2071, 4294901760
        %2073 = vmatmul.f32.gmra.mxu0 %v2072
        %v2074 = vpop.f32.mrf.mxu0
        %v2075 = vand.u32 %v1822, 4294901760
        %v2076 = vsub.f32 %v1822, %v2075
        %v2077 = vand.u32 %v2076, 4294901760
        %v2078 = vsub.f32 %v2076, %v2077
        %v2079 = vand.u32 %v2078, 4294901760
        %2080 = vmatmul.f32.gmra.mxu0 %v2079
        %v2081 = vpop.f32.mrf.mxu0
        %v2082 = vand.u32 %v1825, 4294901760
        %v2083 = vsub.f32 %v1825, %v2082
        %v2084 = vand.u32 %v2083, 4294901760
        %v2085 = vsub.f32 %v2083, %v2084
        %v2086 = vand.u32 %v2085, 4294901760
        %2087 = vmatmul.f32.gmra.mxu0 %v2086
        %v2088 = vpop.f32.mrf.mxu0
        %v2089 = vand.u32 %v1828, 4294901760
        %v2090 = vsub.f32 %v1828, %v2089
        %v2091 = vand.u32 %v2090, 4294901760
        %v2092 = vsub.f32 %v2090, %v2091
        %v2093 = vand.u32 %v2092, 4294901760
        %2094 = vmatmul.f32.gmra.mxu0 %v2093
        %v2095 = vpop.f32.mrf.mxu0
        %2096 = vdwg.mxu0
        %2097 = vmatpush.msra.mxu0 0.0
        %2098 = vmatpush.msra.mxu0 0.0
        %2099 = vmatpush.msra.mxu0 0.0
        %2100 = vmatpush.msra.mxu0 0.0
        %2101 = vmatpush.msra.mxu0 0.0
        %2102 = vmatpush.msra.mxu0 0.0
        %2103 = vmatpush.msra.mxu0 0.0
        %2104 = vmatpush.msra.mxu0 0.0
        %v2105 = vand.u32 %v383, 4294901760
        %v2106 = vsub.f32 %v383, %v2105
        %v2107 = vand.u32 %v2106, 4294901760
        %v2108 = vsub.f32 %v2106, %v2107
        %v2109 = vand.u32 %v2108, 4294901760
        %2110 = vmatpush.msra.mxu0 %v2109
        %v2111 = vand.u32 %v382, 4294901760
        %v2112 = vsub.f32 %v382, %v2111
        %v2113 = vand.u32 %v2112, 4294901760
        %v2114 = vsub.f32 %v2112, %v2113
        %v2115 = vand.u32 %v2114, 4294901760
        %2116 = vmatpush.msra.mxu0 %v2115
        %v2117 = vand.u32 %v381, 4294901760
        %v2118 = vsub.f32 %v381, %v2117
        %v2119 = vand.u32 %v2118, 4294901760
        %v2120 = vsub.f32 %v2118, %v2119
        %v2121 = vand.u32 %v2120, 4294901760
        %2122 = vmatpush.msra.mxu0 %v2121
        %v2123 = vand.u32 %v380, 4294901760
        %v2124 = vsub.f32 %v380, %v2123
        %v2125 = vand.u32 %v2124, 4294901760
        %v2126 = vsub.f32 %v2124, %v2125
        %v2127 = vand.u32 %v2126, 4294901760
        %2128 = vmatpush.msra.mxu0 %v2127
        %v2129 = vand.u32 %v379, 4294901760
        %v2130 = vsub.f32 %v379, %v2129
        %v2131 = vand.u32 %v2130, 4294901760
        %v2132 = vsub.f32 %v2130, %v2131
        %v2133 = vand.u32 %v2132, 4294901760
        %2134 = vmatpush.msra.mxu0 %v2133
        %v2135 = vand.u32 %v378, 4294901760
        %v2136 = vsub.f32 %v378, %v2135
        %v2137 = vand.u32 %v2136, 4294901760
        %v2138 = vsub.f32 %v2136, %v2137
        %v2139 = vand.u32 %v2138, 4294901760
        %2140 = vmatpush.msra.mxu0 %v2139
        %v2141 = vand.u32 %v377, 4294901760
        %v2142 = vsub.f32 %v377, %v2141
        %v2143 = vand.u32 %v2142, 4294901760
        %v2144 = vsub.f32 %v2142, %v2143
        %v2145 = vand.u32 %v2144, 4294901760
        %2146 = vmatpush.msra.mxu0 %v2145
        %v2147 = vand.u32 %v376, 4294901760
        %v2148 = vsub.f32 %v376, %v2147
        %v2149 = vand.u32 %v2148, 4294901760
        %v2150 = vsub.f32 %v2148, %v2149
        %v2151 = vand.u32 %v2150, 4294901760
        %2152 = vmatpush.msra.mxu0 %v2151
        %v2153 = vand.u32 %v1735, 4294901760
        %2154 = vmatmul.f32.gmra.mxu0 %v2153
        %v2155 = vpop.f32.mrf.mxu0
        %v2156 = vadd.f32 %v1861, %v2155
        %v2157 = vand.u32 %v1738, 4294901760
        %2158 = vmatmul.f32.gmra.mxu0 %v2157
        %v2159 = vpop.f32.mrf.mxu0
        %v2160 = vadd.f32 %v1869, %v2159
        %v2161 = vand.u32 %v1741, 4294901760
        %2162 = vmatmul.f32.gmra.mxu0 %v2161
        %v2163 = vpop.f32.mrf.mxu0
        %v2164 = vadd.f32 %v1877, %v2163
        %v2165 = vand.u32 %v1744, 4294901760
        %2166 = vmatmul.f32.gmra.mxu0 %v2165
        %v2167 = vpop.f32.mrf.mxu0
        %v2168 = vadd.f32 %v1885, %v2167
        %v2169 = vand.u32 %v1747, 4294901760
        %2170 = vmatmul.f32.gmra.mxu0 %v2169
        %v2171 = vpop.f32.mrf.mxu0
        %v2172 = vadd.f32 %v1893, %v2171
        %v2173 = vand.u32 %v1750, 4294901760
        %2174 = vmatmul.f32.gmra.mxu0 %v2173
        %v2175 = vpop.f32.mrf.mxu0
        %v2176 = vadd.f32 %v1901, %v2175
        %v2177 = vand.u32 %v1753, 4294901760
        %2178 = vmatmul.f32.gmra.mxu0 %v2177
        %v2179 = vpop.f32.mrf.mxu0
        %v2180 = vadd.f32 %v1909, %v2179
        %v2181 = vand.u32 %v1756, 4294901760
        %2182 = vmatmul.f32.gmra.mxu0 %v2181
        %v2183 = vpop.f32.mrf.mxu0
        %v2184 = vadd.f32 %v1917, %v2183
        %v2185 = vand.u32 %v1759, 4294901760
        %2186 = vmatmul.f32.gmra.mxu0 %v2185
        %v2187 = vpop.f32.mrf.mxu0
        %v2188 = vadd.f32 %v1925, %v2187
        %v2189 = vand.u32 %v1762, 4294901760
        %2190 = vmatmul.f32.gmra.mxu0 %v2189
        %v2191 = vpop.f32.mrf.mxu0
        %v2192 = vand.u32 %v1765, 4294901760
        %2193 = vmatmul.f32.gmra.mxu0 %v2192
        %v2194 = vpop.f32.mrf.mxu0
        %v2195 = vand.u32 %v1768, 4294901760
        %2196 = vmatmul.f32.gmra.mxu0 %v2195
        %v2197 = vpop.f32.mrf.mxu0
        %v2198 = vand.u32 %v1771, 4294901760
        %2199 = vmatmul.f32.gmra.mxu0 %v2198
        %v2200 = vpop.f32.mrf.mxu0
        %v2201 = vand.u32 %v1774, 4294901760
        %2202 = vmatmul.f32.gmra.mxu0 %v2201
        %v2203 = vpop.f32.mrf.mxu0
        %v2204 = vand.u32 %v1777, 4294901760
        %2205 = vmatmul.f32.gmra.mxu0 %v2204
        %v2206 = vpop.f32.mrf.mxu0
        %v2207 = vand.u32 %v1780, 4294901760
        %2208 = vmatmul.f32.gmra.mxu0 %v2207
        %v2209 = vpop.f32.mrf.mxu0
        %v2210 = vand.u32 %v1783, 4294901760
        %2211 = vmatmul.f32.gmra.mxu0 %v2210
        %v2212 = vpop.f32.mrf.mxu0
        %v2213 = vadd.f32 %v1982, %v2212
        %v2214 = vand.u32 %v1786, 4294901760
        %2215 = vmatmul.f32.gmra.mxu0 %v2214
        %v2216 = vpop.f32.mrf.mxu0
        %v2217 = vadd.f32 %v1990, %v2216
        %v2218 = vand.u32 %v1789, 4294901760
        %2219 = vmatmul.f32.gmra.mxu0 %v2218
        %v2220 = vpop.f32.mrf.mxu0
        %v2221 = vadd.f32 %v1998, %v2220
        %v2222 = vand.u32 %v1792, 4294901760
        %2223 = vmatmul.f32.gmra.mxu0 %v2222
        %v2224 = vpop.f32.mrf.mxu0
        %v2225 = vadd.f32 %v2006, %v2224
        %v2226 = vand.u32 %v1795, 4294901760
        %2227 = vmatmul.f32.gmra.mxu0 %v2226
        %v2228 = vpop.f32.mrf.mxu0
        %v2229 = vadd.f32 %v2014, %v2228
        %v2230 = vand.u32 %v1798, 4294901760
        %2231 = vmatmul.f32.gmra.mxu0 %v2230
        %v2232 = vpop.f32.mrf.mxu0
        %v2233 = vadd.f32 %v2022, %v2232
        %v2234 = vand.u32 %v1801, 4294901760
        %2235 = vmatmul.f32.gmra.mxu0 %v2234
        %v2236 = vpop.f32.mrf.mxu0
        %v2237 = vadd.f32 %v2030, %v2236
        %v2238 = vand.u32 %v1804, 4294901760
        %2239 = vmatmul.f32.gmra.mxu0 %v2238
        %v2240 = vpop.f32.mrf.mxu0
        %v2241 = vadd.f32 %v2038, %v2240
        %v2242 = vand.u32 %v1807, 4294901760
        %2243 = vmatmul.f32.gmra.mxu0 %v2242
        %v2244 = vpop.f32.mrf.mxu0
        %v2245 = vadd.f32 %v2046, %v2244
        %v2246 = vand.u32 %v1810, 4294901760
        %2247 = vmatmul.f32.gmra.mxu0 %v2246
        %v2248 = vpop.f32.mrf.mxu0
        %v2249 = vand.u32 %v1813, 4294901760
        %2250 = vmatmul.f32.gmra.mxu0 %v2249
        %v2251 = vpop.f32.mrf.mxu0
        %v2252 = vand.u32 %v1816, 4294901760
        %2253 = vmatmul.f32.gmra.mxu0 %v2252
        %v2254 = vpop.f32.mrf.mxu0
        %v2255 = vand.u32 %v1819, 4294901760
        %2256 = vmatmul.f32.gmra.mxu0 %v2255
        %v2257 = vpop.f32.mrf.mxu0
        %v2258 = vand.u32 %v1822, 4294901760
        %2259 = vmatmul.f32.gmra.mxu0 %v2258
        %v2260 = vpop.f32.mrf.mxu0
        %v2261 = vand.u32 %v1825, 4294901760
        %2262 = vmatmul.f32.gmra.mxu0 %v2261
        %v2263 = vpop.f32.mrf.mxu0
        %v2264 = vand.u32 %v1828, 4294901760
        %2265 = vmatmul.f32.gmra.mxu0 %v2264
        %v2266 = vpop.f32.mrf.mxu0
        %2267 = vdwg.mxu0
        %2268 = vmatpush.msra.mxu0 0.0
        %2269 = vmatpush.msra.mxu0 0.0
        %2270 = vmatpush.msra.mxu0 0.0
        %2271 = vmatpush.msra.mxu0 0.0
        %2272 = vmatpush.msra.mxu0 0.0
        %2273 = vmatpush.msra.mxu0 0.0
        %2274 = vmatpush.msra.mxu0 0.0
        %2275 = vmatpush.msra.mxu0 0.0
        %v2276 = vand.u32 %v383, 4294901760
        %v2277 = vsub.f32 %v383, %v2276
        %2278 = vmatpush.msra.mxu0 %v2277
        %v2279 = vand.u32 %v382, 4294901760
        %v2280 = vsub.f32 %v382, %v2279
        %2281 = vmatpush.msra.mxu0 %v2280
        %v2282 = vand.u32 %v381, 4294901760
        %v2283 = vsub.f32 %v381, %v2282
        %2284 = vmatpush.msra.mxu0 %v2283
        %v2285 = vand.u32 %v380, 4294901760
        %v2286 = vsub.f32 %v380, %v2285
        %2287 = vmatpush.msra.mxu0 %v2286
        %v2288 = vand.u32 %v379, 4294901760
        %v2289 = vsub.f32 %v379, %v2288
        %2290 = vmatpush.msra.mxu0 %v2289
        %v2291 = vand.u32 %v378, 4294901760
        %v2292 = vsub.f32 %v378, %v2291
        %2293 = vmatpush.msra.mxu0 %v2292
        %v2294 = vand.u32 %v377, 4294901760
        %v2295 = vsub.f32 %v377, %v2294
        %2296 = vmatpush.msra.mxu0 %v2295
        %v2297 = vand.u32 %v376, 4294901760
        %v2298 = vsub.f32 %v376, %v2297
        %2299 = vmatpush.msra.mxu0 %v2298
        %v2300 = vand.u32 %v1735, 4294901760
        %v2301 = vsub.f32 %v1735, %v2300
        %2302 = vmatmul.f32.gmra.mxu0 %v2301
        %v2303 = vpop.f32.mrf.mxu0
        %v2304 = vadd.f32 %v2156, %v2303
        %v2305 = vand.u32 %v1738, 4294901760
        %v2306 = vsub.f32 %v1738, %v2305
        %2307 = vmatmul.f32.gmra.mxu0 %v2306
        %v2308 = vpop.f32.mrf.mxu0
        %v2309 = vadd.f32 %v2160, %v2308
        %v2310 = vand.u32 %v1741, 4294901760
        %v2311 = vsub.f32 %v1741, %v2310
        %2312 = vmatmul.f32.gmra.mxu0 %v2311
        %v2313 = vpop.f32.mrf.mxu0
        %v2314 = vadd.f32 %v2164, %v2313
        %v2315 = vand.u32 %v1744, 4294901760
        %v2316 = vsub.f32 %v1744, %v2315
        %2317 = vmatmul.f32.gmra.mxu0 %v2316
        %v2318 = vpop.f32.mrf.mxu0
        %v2319 = vadd.f32 %v2168, %v2318
        %v2320 = vand.u32 %v1747, 4294901760
        %v2321 = vsub.f32 %v1747, %v2320
        %2322 = vmatmul.f32.gmra.mxu0 %v2321
        %v2323 = vpop.f32.mrf.mxu0
        %v2324 = vadd.f32 %v2172, %v2323
        %v2325 = vand.u32 %v1750, 4294901760
        %v2326 = vsub.f32 %v1750, %v2325
        %2327 = vmatmul.f32.gmra.mxu0 %v2326
        %v2328 = vpop.f32.mrf.mxu0
        %v2329 = vadd.f32 %v2176, %v2328
        %v2330 = vand.u32 %v1753, 4294901760
        %v2331 = vsub.f32 %v1753, %v2330
        %2332 = vmatmul.f32.gmra.mxu0 %v2331
        %v2333 = vpop.f32.mrf.mxu0
        %v2334 = vadd.f32 %v2180, %v2333
        %v2335 = vand.u32 %v1756, 4294901760
        %v2336 = vsub.f32 %v1756, %v2335
        %2337 = vmatmul.f32.gmra.mxu0 %v2336
        %v2338 = vpop.f32.mrf.mxu0
        %v2339 = vadd.f32 %v2184, %v2338
        %v2340 = vand.u32 %v1759, 4294901760
        %v2341 = vsub.f32 %v1759, %v2340
        %2342 = vmatmul.f32.gmra.mxu0 %v2341
        %v2343 = vpop.f32.mrf.mxu0
        %v2344 = vadd.f32 %v2188, %v2343
        %v2345 = vand.u32 %v1762, 4294901760
        %v2346 = vsub.f32 %v1762, %v2345
        %2347 = vmatmul.f32.gmra.mxu0 %v2346
        %v2348 = vpop.f32.mrf.mxu0
        %v2349 = vand.u32 %v1765, 4294901760
        %v2350 = vsub.f32 %v1765, %v2349
        %2351 = vmatmul.f32.gmra.mxu0 %v2350
        %v2352 = vpop.f32.mrf.mxu0
        %v2353 = vand.u32 %v1768, 4294901760
        %v2354 = vsub.f32 %v1768, %v2353
        %2355 = vmatmul.f32.gmra.mxu0 %v2354
        %v2356 = vpop.f32.mrf.mxu0
        %v2357 = vand.u32 %v1771, 4294901760
        %v2358 = vsub.f32 %v1771, %v2357
        %2359 = vmatmul.f32.gmra.mxu0 %v2358
        %v2360 = vpop.f32.mrf.mxu0
        %v2361 = vand.u32 %v1774, 4294901760
        %v2362 = vsub.f32 %v1774, %v2361
        %2363 = vmatmul.f32.gmra.mxu0 %v2362
        %v2364 = vpop.f32.mrf.mxu0
        %v2365 = vand.u32 %v1777, 4294901760
        %v2366 = vsub.f32 %v1777, %v2365
        %2367 = vmatmul.f32.gmra.mxu0 %v2366
        %v2368 = vpop.f32.mrf.mxu0
        %v2369 = vand.u32 %v1780, 4294901760
        %v2370 = vsub.f32 %v1780, %v2369
        %2371 = vmatmul.f32.gmra.mxu0 %v2370
        %v2372 = vpop.f32.mrf.mxu0
        %v2373 = vand.u32 %v1783, 4294901760
        %v2374 = vsub.f32 %v1783, %v2373
        %2375 = vmatmul.f32.gmra.mxu0 %v2374
        %v2376 = vpop.f32.mrf.mxu0
        %v2377 = vadd.f32 %v2213, %v2376
        %v2378 = vand.u32 %v1786, 4294901760
        %v2379 = vsub.f32 %v1786, %v2378
        %2380 = vmatmul.f32.gmra.mxu0 %v2379
        %v2381 = vpop.f32.mrf.mxu0
        %v2382 = vadd.f32 %v2217, %v2381
        %v2383 = vand.u32 %v1789, 4294901760
        %v2384 = vsub.f32 %v1789, %v2383
        %2385 = vmatmul.f32.gmra.mxu0 %v2384
        %v2386 = vpop.f32.mrf.mxu0
        %v2387 = vadd.f32 %v2221, %v2386
        %v2388 = vand.u32 %v1792, 4294901760
        %v2389 = vsub.f32 %v1792, %v2388
        %2390 = vmatmul.f32.gmra.mxu0 %v2389
        %v2391 = vpop.f32.mrf.mxu0
        %v2392 = vadd.f32 %v2225, %v2391
        %v2393 = vand.u32 %v1795, 4294901760
        %v2394 = vsub.f32 %v1795, %v2393
        %2395 = vmatmul.f32.gmra.mxu0 %v2394
        %v2396 = vpop.f32.mrf.mxu0
        %v2397 = vadd.f32 %v2229, %v2396
        %v2398 = vand.u32 %v1798, 4294901760
        %v2399 = vsub.f32 %v1798, %v2398
        %2400 = vmatmul.f32.gmra.mxu0 %v2399
        %v2401 = vpop.f32.mrf.mxu0
        %v2402 = vadd.f32 %v2233, %v2401
        %v2403 = vand.u32 %v1801, 4294901760
        %v2404 = vsub.f32 %v1801, %v2403
        %2405 = vmatmul.f32.gmra.mxu0 %v2404
        %v2406 = vpop.f32.mrf.mxu0
        %v2407 = vadd.f32 %v2237, %v2406
        %v2408 = vand.u32 %v1804, 4294901760
        %v2409 = vsub.f32 %v1804, %v2408
        %2410 = vmatmul.f32.gmra.mxu0 %v2409
        %v2411 = vpop.f32.mrf.mxu0
        %v2412 = vadd.f32 %v2241, %v2411
        %v2413 = vand.u32 %v1807, 4294901760
        %v2414 = vsub.f32 %v1807, %v2413
        %2415 = vmatmul.f32.gmra.mxu0 %v2414
        %v2416 = vpop.f32.mrf.mxu0
        %v2417 = vadd.f32 %v2245, %v2416
        %v2418 = vand.u32 %v1810, 4294901760
        %v2419 = vsub.f32 %v1810, %v2418
        %2420 = vmatmul.f32.gmra.mxu0 %v2419
        %v2421 = vpop.f32.mrf.mxu0
        %v2422 = vand.u32 %v1813, 4294901760
        %v2423 = vsub.f32 %v1813, %v2422
        %2424 = vmatmul.f32.gmra.mxu0 %v2423
        %v2425 = vpop.f32.mrf.mxu0
        %v2426 = vand.u32 %v1816, 4294901760
        %v2427 = vsub.f32 %v1816, %v2426
        %2428 = vmatmul.f32.gmra.mxu0 %v2427
        %v2429 = vpop.f32.mrf.mxu0
        %v2430 = vand.u32 %v1819, 4294901760
        %v2431 = vsub.f32 %v1819, %v2430
        %2432 = vmatmul.f32.gmra.mxu0 %v2431
        %v2433 = vpop.f32.mrf.mxu0
        %v2434 = vand.u32 %v1822, 4294901760
        %v2435 = vsub.f32 %v1822, %v2434
        %2436 = vmatmul.f32.gmra.mxu0 %v2435
        %v2437 = vpop.f32.mrf.mxu0
        %v2438 = vand.u32 %v1825, 4294901760
        %v2439 = vsub.f32 %v1825, %v2438
        %2440 = vmatmul.f32.gmra.mxu0 %v2439
        %v2441 = vpop.f32.mrf.mxu0
        %v2442 = vand.u32 %v1828, 4294901760
        %v2443 = vsub.f32 %v1828, %v2442
        %2444 = vmatmul.f32.gmra.mxu0 %v2443
        %v2445 = vpop.f32.mrf.mxu0
        %2446 = vdwg.mxu0
        %2447 = vmatpush.msra.mxu0 0.0
        %2448 = vmatpush.msra.mxu0 0.0
        %2449 = vmatpush.msra.mxu0 0.0
        %2450 = vmatpush.msra.mxu0 0.0
        %2451 = vmatpush.msra.mxu0 0.0
        %2452 = vmatpush.msra.mxu0 0.0
        %2453 = vmatpush.msra.mxu0 0.0
        %2454 = vmatpush.msra.mxu0 0.0
        %v2455 = vand.u32 %v383, 4294901760
        %2456 = vmatpush.msra.mxu0 %v2455
        %v2457 = vand.u32 %v382, 4294901760
        %2458 = vmatpush.msra.mxu0 %v2457
        %v2459 = vand.u32 %v381, 4294901760
        %2460 = vmatpush.msra.mxu0 %v2459
        %v2461 = vand.u32 %v380, 4294901760
        %2462 = vmatpush.msra.mxu0 %v2461
        %v2463 = vand.u32 %v379, 4294901760
        %2464 = vmatpush.msra.mxu0 %v2463
        %v2465 = vand.u32 %v378, 4294901760
        %2466 = vmatpush.msra.mxu0 %v2465
        %v2467 = vand.u32 %v377, 4294901760
        %2468 = vmatpush.msra.mxu0 %v2467
        %v2469 = vand.u32 %v376, 4294901760
        %2470 = vmatpush.msra.mxu0 %v2469
        %v2471 = vand.u32 %v1735, 4294901760
        %v2472 = vsub.f32 %v1735, %v2471
        %v2473 = vand.u32 %v2472, 4294901760
        %2474 = vmatmul.f32.gmra.mxu0 %v2473
        %v2475 = vpop.f32.mrf.mxu0
        %v2476 = vadd.f32 %v2304, %v2475
        %v2477 = vand.u32 %v1738, 4294901760
        %v2478 = vsub.f32 %v1738, %v2477
        %v2479 = vand.u32 %v2478, 4294901760
        %2480 = vmatmul.f32.gmra.mxu0 %v2479
        %v2481 = vpop.f32.mrf.mxu0
        %v2482 = vadd.f32 %v2309, %v2481
        %v2483 = vand.u32 %v1741, 4294901760
        %v2484 = vsub.f32 %v1741, %v2483
        %v2485 = vand.u32 %v2484, 4294901760
        %2486 = vmatmul.f32.gmra.mxu0 %v2485
        %v2487 = vpop.f32.mrf.mxu0
        %v2488 = vadd.f32 %v2314, %v2487
        %v2489 = vand.u32 %v1744, 4294901760
        %v2490 = vsub.f32 %v1744, %v2489
        %v2491 = vand.u32 %v2490, 4294901760
        %2492 = vmatmul.f32.gmra.mxu0 %v2491
        %v2493 = vpop.f32.mrf.mxu0
        %v2494 = vadd.f32 %v2319, %v2493
        %v2495 = vand.u32 %v1747, 4294901760
        %v2496 = vsub.f32 %v1747, %v2495
        %v2497 = vand.u32 %v2496, 4294901760
        %2498 = vmatmul.f32.gmra.mxu0 %v2497
        %v2499 = vpop.f32.mrf.mxu0
        %v2500 = vadd.f32 %v2324, %v2499
        %v2501 = vand.u32 %v1750, 4294901760
        %v2502 = vsub.f32 %v1750, %v2501
        %v2503 = vand.u32 %v2502, 4294901760
        %2504 = vmatmul.f32.gmra.mxu0 %v2503
        %v2505 = vpop.f32.mrf.mxu0
        %v2506 = vadd.f32 %v2329, %v2505
        %v2507 = vand.u32 %v1753, 4294901760
        %v2508 = vsub.f32 %v1753, %v2507
        %v2509 = vand.u32 %v2508, 4294901760
        %2510 = vmatmul.f32.gmra.mxu0 %v2509
        %v2511 = vpop.f32.mrf.mxu0
        %v2512 = vadd.f32 %v2334, %v2511
        %v2513 = vand.u32 %v1756, 4294901760
        %v2514 = vsub.f32 %v1756, %v2513
        %v2515 = vand.u32 %v2514, 4294901760
        %2516 = vmatmul.f32.gmra.mxu0 %v2515
        %v2517 = vpop.f32.mrf.mxu0
        %v2518 = vadd.f32 %v2339, %v2517
        %v2519 = vand.u32 %v1759, 4294901760
        %v2520 = vsub.f32 %v1759, %v2519
        %v2521 = vand.u32 %v2520, 4294901760
        %2522 = vmatmul.f32.gmra.mxu0 %v2521
        %v2523 = vpop.f32.mrf.mxu0
        %v2524 = vadd.f32 %v2344, %v2523
        %v2525 = vand.u32 %v1762, 4294901760
        %v2526 = vsub.f32 %v1762, %v2525
        %v2527 = vand.u32 %v2526, 4294901760
        %2528 = vmatmul.f32.gmra.mxu0 %v2527
        %v2529 = vpop.f32.mrf.mxu0
        %v2530 = vand.u32 %v1765, 4294901760
        %v2531 = vsub.f32 %v1765, %v2530
        %v2532 = vand.u32 %v2531, 4294901760
        %2533 = vmatmul.f32.gmra.mxu0 %v2532
        %v2534 = vpop.f32.mrf.mxu0
        %v2535 = vand.u32 %v1768, 4294901760
        %v2536 = vsub.f32 %v1768, %v2535
        %v2537 = vand.u32 %v2536, 4294901760
        %2538 = vmatmul.f32.gmra.mxu0 %v2537
        %v2539 = vpop.f32.mrf.mxu0
        %v2540 = vand.u32 %v1771, 4294901760
        %v2541 = vsub.f32 %v1771, %v2540
        %v2542 = vand.u32 %v2541, 4294901760
        %2543 = vmatmul.f32.gmra.mxu0 %v2542
        %v2544 = vpop.f32.mrf.mxu0
        %v2545 = vand.u32 %v1774, 4294901760
        %v2546 = vsub.f32 %v1774, %v2545
        %v2547 = vand.u32 %v2546, 4294901760
        %2548 = vmatmul.f32.gmra.mxu0 %v2547
        %v2549 = vpop.f32.mrf.mxu0
        %v2550 = vand.u32 %v1777, 4294901760
        %v2551 = vsub.f32 %v1777, %v2550
        %v2552 = vand.u32 %v2551, 4294901760
        %2553 = vmatmul.f32.gmra.mxu0 %v2552
        %v2554 = vpop.f32.mrf.mxu0
        %v2555 = vand.u32 %v1780, 4294901760
        %v2556 = vsub.f32 %v1780, %v2555
        %v2557 = vand.u32 %v2556, 4294901760
        %2558 = vmatmul.f32.gmra.mxu0 %v2557
        %v2559 = vpop.f32.mrf.mxu0
        %v2560 = vand.u32 %v1783, 4294901760
        %v2561 = vsub.f32 %v1783, %v2560
        %v2562 = vand.u32 %v2561, 4294901760
        %2563 = vmatmul.f32.gmra.mxu0 %v2562
        %v2564 = vpop.f32.mrf.mxu0
        %v2565 = vadd.f32 %v2377, %v2564
        %v2566 = vand.u32 %v1786, 4294901760
        %v2567 = vsub.f32 %v1786, %v2566
        %v2568 = vand.u32 %v2567, 4294901760
        %2569 = vmatmul.f32.gmra.mxu0 %v2568
        %v2570 = vpop.f32.mrf.mxu0
        %v2571 = vadd.f32 %v2382, %v2570
        %v2572 = vand.u32 %v1789, 4294901760
        %v2573 = vsub.f32 %v1789, %v2572
        %v2574 = vand.u32 %v2573, 4294901760
        %2575 = vmatmul.f32.gmra.mxu0 %v2574
        %v2576 = vpop.f32.mrf.mxu0
        %v2577 = vadd.f32 %v2387, %v2576
        %v2578 = vand.u32 %v1792, 4294901760
        %v2579 = vsub.f32 %v1792, %v2578
        %v2580 = vand.u32 %v2579, 4294901760
        %2581 = vmatmul.f32.gmra.mxu0 %v2580
        %v2582 = vpop.f32.mrf.mxu0
        %v2583 = vadd.f32 %v2392, %v2582
        %v2584 = vand.u32 %v1795, 4294901760
        %v2585 = vsub.f32 %v1795, %v2584
        %v2586 = vand.u32 %v2585, 4294901760
        %2587 = vmatmul.f32.gmra.mxu0 %v2586
        %v2588 = vpop.f32.mrf.mxu0
        %v2589 = vadd.f32 %v2397, %v2588
        %v2590 = vand.u32 %v1798, 4294901760
        %v2591 = vsub.f32 %v1798, %v2590
        %v2592 = vand.u32 %v2591, 4294901760
        %2593 = vmatmul.f32.gmra.mxu0 %v2592
        %v2594 = vpop.f32.mrf.mxu0
        %v2595 = vadd.f32 %v2402, %v2594
        %v2596 = vand.u32 %v1801, 4294901760
        %v2597 = vsub.f32 %v1801, %v2596
        %v2598 = vand.u32 %v2597, 4294901760
        %2599 = vmatmul.f32.gmra.mxu0 %v2598
        %v2600 = vpop.f32.mrf.mxu0
        %v2601 = vadd.f32 %v2407, %v2600
        %v2602 = vand.u32 %v1804, 4294901760
        %v2603 = vsub.f32 %v1804, %v2602
        %v2604 = vand.u32 %v2603, 4294901760
        %2605 = vmatmul.f32.gmra.mxu0 %v2604
        %v2606 = vpop.f32.mrf.mxu0
        %v2607 = vadd.f32 %v2412, %v2606
        %v2608 = vand.u32 %v1807, 4294901760
        %v2609 = vsub.f32 %v1807, %v2608
        %v2610 = vand.u32 %v2609, 4294901760
        %2611 = vmatmul.f32.gmra.mxu0 %v2610
        %v2612 = vpop.f32.mrf.mxu0
        %v2613 = vadd.f32 %v2417, %v2612
        %v2614 = vand.u32 %v1810, 4294901760
        %v2615 = vsub.f32 %v1810, %v2614
        %v2616 = vand.u32 %v2615, 4294901760
        %2617 = vmatmul.f32.gmra.mxu0 %v2616
        %v2618 = vpop.f32.mrf.mxu0
        %v2619 = vand.u32 %v1813, 4294901760
        %v2620 = vsub.f32 %v1813, %v2619
        %v2621 = vand.u32 %v2620, 4294901760
        %2622 = vmatmul.f32.gmra.mxu0 %v2621
        %v2623 = vpop.f32.mrf.mxu0
        %v2624 = vand.u32 %v1816, 4294901760
        %v2625 = vsub.f32 %v1816, %v2624
        %v2626 = vand.u32 %v2625, 4294901760
        %2627 = vmatmul.f32.gmra.mxu0 %v2626
        %v2628 = vpop.f32.mrf.mxu0
        %v2629 = vand.u32 %v1819, 4294901760
        %v2630 = vsub.f32 %v1819, %v2629
        %v2631 = vand.u32 %v2630, 4294901760
        %2632 = vmatmul.f32.gmra.mxu0 %v2631
        %v2633 = vpop.f32.mrf.mxu0
        %v2634 = vand.u32 %v1822, 4294901760
        %v2635 = vsub.f32 %v1822, %v2634
        %v2636 = vand.u32 %v2635, 4294901760
        %2637 = vmatmul.f32.gmra.mxu0 %v2636
        %v2638 = vpop.f32.mrf.mxu0
        %v2639 = vand.u32 %v1825, 4294901760
        %v2640 = vsub.f32 %v1825, %v2639
        %v2641 = vand.u32 %v2640, 4294901760
        %2642 = vmatmul.f32.gmra.mxu0 %v2641
        %v2643 = vpop.f32.mrf.mxu0
        %v2644 = vand.u32 %v1828, 4294901760
        %v2645 = vsub.f32 %v1828, %v2644
        %v2646 = vand.u32 %v2645, 4294901760
        %2647 = vmatmul.f32.gmra.mxu0 %v2646
        %v2648 = vpop.f32.mrf.mxu0
        %2649 = vdwg.mxu0
        %2650 = vmatpush.msra.mxu0 0.0
        %2651 = vmatpush.msra.mxu0 0.0
        %2652 = vmatpush.msra.mxu0 0.0
        %2653 = vmatpush.msra.mxu0 0.0
        %2654 = vmatpush.msra.mxu0 0.0
        %2655 = vmatpush.msra.mxu0 0.0
        %2656 = vmatpush.msra.mxu0 0.0
        %2657 = vmatpush.msra.mxu0 0.0
        %v2658 = vand.u32 %v383, 4294901760
        %v2659 = vsub.f32 %v383, %v2658
        %v2660 = vand.u32 %v2659, 4294901760
        %2661 = vmatpush.msra.mxu0 %v2660
        %v2662 = vand.u32 %v382, 4294901760
        %v2663 = vsub.f32 %v382, %v2662
        %v2664 = vand.u32 %v2663, 4294901760
        %2665 = vmatpush.msra.mxu0 %v2664
        %v2666 = vand.u32 %v381, 4294901760
        %v2667 = vsub.f32 %v381, %v2666
        %v2668 = vand.u32 %v2667, 4294901760
        %2669 = vmatpush.msra.mxu0 %v2668
        %v2670 = vand.u32 %v380, 4294901760
        %v2671 = vsub.f32 %v380, %v2670
        %v2672 = vand.u32 %v2671, 4294901760
        %2673 = vmatpush.msra.mxu0 %v2672
        %v2674 = vand.u32 %v379, 4294901760
        %v2675 = vsub.f32 %v379, %v2674
        %v2676 = vand.u32 %v2675, 4294901760
        %2677 = vmatpush.msra.mxu0 %v2676
        %v2678 = vand.u32 %v378, 4294901760
        %v2679 = vsub.f32 %v378, %v2678
        %v2680 = vand.u32 %v2679, 4294901760
        %2681 = vmatpush.msra.mxu0 %v2680
        %v2682 = vand.u32 %v377, 4294901760
        %v2683 = vsub.f32 %v377, %v2682
        %v2684 = vand.u32 %v2683, 4294901760
        %2685 = vmatpush.msra.mxu0 %v2684
        %v2686 = vand.u32 %v376, 4294901760
        %v2687 = vsub.f32 %v376, %v2686
        %v2688 = vand.u32 %v2687, 4294901760
        %2689 = vmatpush.msra.mxu0 %v2688
        %v2690 = vand.u32 %v1735, 4294901760
        %2691 = vmatmul.f32.gmra.mxu0 %v2690
        %v2692 = vpop.f32.mrf.mxu0
        %v2693 = vadd.f32 %v2476, %v2692
        %v2694 = vand.u32 %v1738, 4294901760
        %2695 = vmatmul.f32.gmra.mxu0 %v2694
        %v2696 = vpop.f32.mrf.mxu0
        %v2697 = vadd.f32 %v2482, %v2696
        %v2698 = vand.u32 %v1741, 4294901760
        %2699 = vmatmul.f32.gmra.mxu0 %v2698
        %v2700 = vpop.f32.mrf.mxu0
        %v2701 = vadd.f32 %v2488, %v2700
        %v2702 = vand.u32 %v1744, 4294901760
        %2703 = vmatmul.f32.gmra.mxu0 %v2702
        %v2704 = vpop.f32.mrf.mxu0
        %v2705 = vadd.f32 %v2494, %v2704
        %v2706 = vand.u32 %v1747, 4294901760
        %2707 = vmatmul.f32.gmra.mxu0 %v2706
        %v2708 = vpop.f32.mrf.mxu0
        %v2709 = vadd.f32 %v2500, %v2708
        %v2710 = vand.u32 %v1750, 4294901760
        %2711 = vmatmul.f32.gmra.mxu0 %v2710
        %v2712 = vpop.f32.mrf.mxu0
        %v2713 = vadd.f32 %v2506, %v2712
        %v2714 = vand.u32 %v1753, 4294901760
        %2715 = vmatmul.f32.gmra.mxu0 %v2714
        %v2716 = vpop.f32.mrf.mxu0
        %v2717 = vadd.f32 %v2512, %v2716
        %v2718 = vand.u32 %v1756, 4294901760
        %2719 = vmatmul.f32.gmra.mxu0 %v2718
        %v2720 = vpop.f32.mrf.mxu0
        %v2721 = vadd.f32 %v2518, %v2720
        %v2722 = vand.u32 %v1759, 4294901760
        %2723 = vmatmul.f32.gmra.mxu0 %v2722
        %v2724 = vpop.f32.mrf.mxu0
        %v2725 = vadd.f32 %v2524, %v2724
        %v2726 = vand.u32 %v1762, 4294901760
        %2727 = vmatmul.f32.gmra.mxu0 %v2726
        %v2728 = vpop.f32.mrf.mxu0
        %v2729 = vand.u32 %v1765, 4294901760
        %2730 = vmatmul.f32.gmra.mxu0 %v2729
        %v2731 = vpop.f32.mrf.mxu0
        %v2732 = vand.u32 %v1768, 4294901760
        %2733 = vmatmul.f32.gmra.mxu0 %v2732
        %v2734 = vpop.f32.mrf.mxu0
        %v2735 = vand.u32 %v1771, 4294901760
        %2736 = vmatmul.f32.gmra.mxu0 %v2735
        %v2737 = vpop.f32.mrf.mxu0
        %v2738 = vand.u32 %v1774, 4294901760
        %2739 = vmatmul.f32.gmra.mxu0 %v2738
        %v2740 = vpop.f32.mrf.mxu0
        %v2741 = vand.u32 %v1777, 4294901760
        %2742 = vmatmul.f32.gmra.mxu0 %v2741
        %v2743 = vpop.f32.mrf.mxu0
        %v2744 = vand.u32 %v1780, 4294901760
        %2745 = vmatmul.f32.gmra.mxu0 %v2744
        %v2746 = vpop.f32.mrf.mxu0
        %v2747 = vand.u32 %v1783, 4294901760
        %2748 = vmatmul.f32.gmra.mxu0 %v2747
        %v2749 = vpop.f32.mrf.mxu0
        %v2750 = vadd.f32 %v2565, %v2749
        %v2751 = vand.u32 %v1786, 4294901760
        %2752 = vmatmul.f32.gmra.mxu0 %v2751
        %v2753 = vpop.f32.mrf.mxu0
        %v2754 = vadd.f32 %v2571, %v2753
        %v2755 = vand.u32 %v1789, 4294901760
        %2756 = vmatmul.f32.gmra.mxu0 %v2755
        %v2757 = vpop.f32.mrf.mxu0
        %v2758 = vadd.f32 %v2577, %v2757
        %v2759 = vand.u32 %v1792, 4294901760
        %2760 = vmatmul.f32.gmra.mxu0 %v2759
        %v2761 = vpop.f32.mrf.mxu0
        %v2762 = vadd.f32 %v2583, %v2761
        %v2763 = vand.u32 %v1795, 4294901760
        %2764 = vmatmul.f32.gmra.mxu0 %v2763
        %v2765 = vpop.f32.mrf.mxu0
        %v2766 = vadd.f32 %v2589, %v2765
        %v2767 = vand.u32 %v1798, 4294901760
        %2768 = vmatmul.f32.gmra.mxu0 %v2767
        %v2769 = vpop.f32.mrf.mxu0
        %v2770 = vadd.f32 %v2595, %v2769
        %v2771 = vand.u32 %v1801, 4294901760
        %2772 = vmatmul.f32.gmra.mxu0 %v2771
        %v2773 = vpop.f32.mrf.mxu0
        %v2774 = vadd.f32 %v2601, %v2773
        %v2775 = vand.u32 %v1804, 4294901760
        %2776 = vmatmul.f32.gmra.mxu0 %v2775
        %v2777 = vpop.f32.mrf.mxu0
        %v2778 = vadd.f32 %v2607, %v2777
        %v2779 = vand.u32 %v1807, 4294901760
        %2780 = vmatmul.f32.gmra.mxu0 %v2779
        %v2781 = vpop.f32.mrf.mxu0
        %v2782 = vadd.f32 %v2613, %v2781
        %v2783 = vand.u32 %v1810, 4294901760
        %2784 = vmatmul.f32.gmra.mxu0 %v2783
        %v2785 = vpop.f32.mrf.mxu0
        %v2786 = vand.u32 %v1813, 4294901760
        %2787 = vmatmul.f32.gmra.mxu0 %v2786
        %v2788 = vpop.f32.mrf.mxu0
        %v2789 = vand.u32 %v1816, 4294901760
        %2790 = vmatmul.f32.gmra.mxu0 %v2789
        %v2791 = vpop.f32.mrf.mxu0
        %v2792 = vand.u32 %v1819, 4294901760
        %2793 = vmatmul.f32.gmra.mxu0 %v2792
        %v2794 = vpop.f32.mrf.mxu0
        %v2795 = vand.u32 %v1822, 4294901760
        %2796 = vmatmul.f32.gmra.mxu0 %v2795
        %v2797 = vpop.f32.mrf.mxu0
        %v2798 = vand.u32 %v1825, 4294901760
        %2799 = vmatmul.f32.gmra.mxu0 %v2798
        %v2800 = vpop.f32.mrf.mxu0
        %v2801 = vand.u32 %v1828, 4294901760
        %2802 = vmatmul.f32.gmra.mxu0 %v2801
        %v2803 = vpop.f32.mrf.mxu0
        %2804 = vdwg.mxu0
        %2805 = vmatpush.msra.mxu0 0.0
        %2806 = vmatpush.msra.mxu0 0.0
        %2807 = vmatpush.msra.mxu0 0.0
        %2808 = vmatpush.msra.mxu0 0.0
        %2809 = vmatpush.msra.mxu0 0.0
        %2810 = vmatpush.msra.mxu0 0.0
        %2811 = vmatpush.msra.mxu0 0.0
        %2812 = vmatpush.msra.mxu0 0.0
        %v2813 = vand.u32 %v383, 4294901760
        %2814 = vmatpush.msra.mxu0 %v2813
        %v2815 = vand.u32 %v382, 4294901760
        %2816 = vmatpush.msra.mxu0 %v2815
        %v2817 = vand.u32 %v381, 4294901760
        %2818 = vmatpush.msra.mxu0 %v2817
        %v2819 = vand.u32 %v380, 4294901760
        %2820 = vmatpush.msra.mxu0 %v2819
        %v2821 = vand.u32 %v379, 4294901760
        %2822 = vmatpush.msra.mxu0 %v2821
        %v2823 = vand.u32 %v378, 4294901760
        %2824 = vmatpush.msra.mxu0 %v2823
        %v2825 = vand.u32 %v377, 4294901760
        %2826 = vmatpush.msra.mxu0 %v2825
        %v2827 = vand.u32 %v376, 4294901760
        %2828 = vmatpush.msra.mxu0 %v2827
        %v2829 = vand.u32 %v1735, 4294901760
        %2830 = vmatmul.f32.gmra.mxu0 %v2829
        %v2831 = vpop.f32.mrf.mxu0
        %v2832 = vadd.f32 %v2693, %v2831
        %v2833 = vand.u32 %v1738, 4294901760
        %2834 = vmatmul.f32.gmra.mxu0 %v2833
        %v2835 = vpop.f32.mrf.mxu0
        %v2836 = vadd.f32 %v2697, %v2835
        %v2837 = vand.u32 %v1741, 4294901760
        %2838 = vmatmul.f32.gmra.mxu0 %v2837
        %v2839 = vpop.f32.mrf.mxu0
        %v2840 = vadd.f32 %v2701, %v2839
        %v2841 = vand.u32 %v1744, 4294901760
        %2842 = vmatmul.f32.gmra.mxu0 %v2841
        %v2843 = vpop.f32.mrf.mxu0
        %v2844 = vadd.f32 %v2705, %v2843
        %v2845 = vand.u32 %v1747, 4294901760
        %2846 = vmatmul.f32.gmra.mxu0 %v2845
        %v2847 = vpop.f32.mrf.mxu0
        %v2848 = vadd.f32 %v2709, %v2847
        %v2849 = vand.u32 %v1750, 4294901760
        %2850 = vmatmul.f32.gmra.mxu0 %v2849
        %v2851 = vpop.f32.mrf.mxu0
        %v2852 = vadd.f32 %v2713, %v2851
        %v2853 = vand.u32 %v1753, 4294901760
        %2854 = vmatmul.f32.gmra.mxu0 %v2853
        %v2855 = vpop.f32.mrf.mxu0
        %v2856 = vadd.f32 %v2717, %v2855
        %v2857 = vand.u32 %v1756, 4294901760
        %2858 = vmatmul.f32.gmra.mxu0 %v2857
        %v2859 = vpop.f32.mrf.mxu0
        %v2860 = vadd.f32 %v2721, %v2859
        %v2861 = vand.u32 %v1759, 4294901760
        %2862 = vmatmul.f32.gmra.mxu0 %v2861
        %v2863 = vpop.f32.mrf.mxu0
        %v2864 = vadd.f32 %v2725, %v2863
        %v2865 = vand.u32 %v1762, 4294901760
        %2866 = vmatmul.f32.gmra.mxu0 %v2865
        %v2867 = vpop.f32.mrf.mxu0
        %v2868 = vand.u32 %v1765, 4294901760
        %2869 = vmatmul.f32.gmra.mxu0 %v2868
        %v2870 = vpop.f32.mrf.mxu0
        %v2871 = vand.u32 %v1768, 4294901760
        %2872 = vmatmul.f32.gmra.mxu0 %v2871
        %v2873 = vpop.f32.mrf.mxu0
        %v2874 = vand.u32 %v1771, 4294901760
        %2875 = vmatmul.f32.gmra.mxu0 %v2874
        %v2876 = vpop.f32.mrf.mxu0
        %v2877 = vand.u32 %v1774, 4294901760
        %2878 = vmatmul.f32.gmra.mxu0 %v2877
        %v2879 = vpop.f32.mrf.mxu0
        %v2880 = vand.u32 %v1777, 4294901760
        %2881 = vmatmul.f32.gmra.mxu0 %v2880
        %v2882 = vpop.f32.mrf.mxu0
        %v2883 = vand.u32 %v1780, 4294901760
        %2884 = vmatmul.f32.gmra.mxu0 %v2883
        %v2885 = vpop.f32.mrf.mxu0
        %v2886 = vand.u32 %v1783, 4294901760
        %2887 = vmatmul.f32.gmra.mxu0 %v2886
        %v2888 = vpop.f32.mrf.mxu0
        %v2889 = vadd.f32 %v2750, %v2888
        %v2890 = vand.u32 %v1786, 4294901760
        %2891 = vmatmul.f32.gmra.mxu0 %v2890
        %v2892 = vpop.f32.mrf.mxu0
        %v2893 = vadd.f32 %v2754, %v2892
        %v2894 = vand.u32 %v1789, 4294901760
        %2895 = vmatmul.f32.gmra.mxu0 %v2894
        %v2896 = vpop.f32.mrf.mxu0
        %v2897 = vadd.f32 %v2758, %v2896
        %v2898 = vand.u32 %v1792, 4294901760
        %2899 = vmatmul.f32.gmra.mxu0 %v2898
        %v2900 = vpop.f32.mrf.mxu0
        %v2901 = vadd.f32 %v2762, %v2900
        %v2902 = vand.u32 %v1795, 4294901760
        %2903 = vmatmul.f32.gmra.mxu0 %v2902
        %v2904 = vpop.f32.mrf.mxu0
        %v2905 = vadd.f32 %v2766, %v2904
        %v2906 = vand.u32 %v1798, 4294901760
        %2907 = vmatmul.f32.gmra.mxu0 %v2906
        %v2908 = vpop.f32.mrf.mxu0
        %v2909 = vadd.f32 %v2770, %v2908
        %v2910 = vand.u32 %v1801, 4294901760
        %2911 = vmatmul.f32.gmra.mxu0 %v2910
        %v2912 = vpop.f32.mrf.mxu0
        %v2913 = vadd.f32 %v2774, %v2912
        %v2914 = vand.u32 %v1804, 4294901760
        %2915 = vmatmul.f32.gmra.mxu0 %v2914
        %v2916 = vpop.f32.mrf.mxu0
        %v2917 = vadd.f32 %v2778, %v2916
        %v2918 = vand.u32 %v1807, 4294901760
        %2919 = vmatmul.f32.gmra.mxu0 %v2918
        %v2920 = vpop.f32.mrf.mxu0
        %v2921 = vadd.f32 %v2782, %v2920
        %v2922 = vand.u32 %v1810, 4294901760
        %2923 = vmatmul.f32.gmra.mxu0 %v2922
        %v2924 = vpop.f32.mrf.mxu0
        %v2925 = vand.u32 %v1813, 4294901760
        %2926 = vmatmul.f32.gmra.mxu0 %v2925
        %v2927 = vpop.f32.mrf.mxu0
        %v2928 = vand.u32 %v1816, 4294901760
        %2929 = vmatmul.f32.gmra.mxu0 %v2928
        %v2930 = vpop.f32.mrf.mxu0
        %v2931 = vand.u32 %v1819, 4294901760
        %2932 = vmatmul.f32.gmra.mxu0 %v2931
        %v2933 = vpop.f32.mrf.mxu0
        %v2934 = vand.u32 %v1822, 4294901760
        %2935 = vmatmul.f32.gmra.mxu0 %v2934
        %v2936 = vpop.f32.mrf.mxu0
        %v2937 = vand.u32 %v1825, 4294901760
        %2938 = vmatmul.f32.gmra.mxu0 %v2937
        %v2939 = vpop.f32.mrf.mxu0
        %v2940 = vand.u32 %v1828, 4294901760
        %2941 = vmatmul.f32.gmra.mxu0 %v2940
        %v2942 = vpop.f32.mrf.mxu0
        %2943 = vdwg.mxu0
        %v2944 = vmul.f32 %v2832, %v2832
        %v2945 = vmul.f32 %v2836, %v2836
        %v2946 = vmul.f32 %v2840, %v2840
        %v2947 = vmul.f32 %v2844, %v2844
        %v2948 = vmul.f32 %v2848, %v2848
        %v2949 = vmul.f32 %v2852, %v2852
        %v2950 = vmul.f32 %v2856, %v2856
        %v2951 = vmul.f32 %v2860, %v2860
        %v2952 = vmul.f32 %v2864, %v2864
        %v2953 = vmul.f32 %v2889, %v2889
        %v2954 = vmul.f32 %v2893, %v2893
        %v2955 = vmul.f32 %v2897, %v2897
        %v2956 = vmul.f32 %v2901, %v2901
        %v2957 = vmul.f32 %v2905, %v2905
        %v2958 = vmul.f32 %v2909, %v2909
        %v2959 = vmul.f32 %v2913, %v2913
        %v2960 = vmul.f32 %v2917, %v2917
        %v2961 = vmul.f32 %v2921, %v2921
        %v2962 = vadd.f32 %v2944, %v2953
        %v2963 = vadd.f32 %v2945, %v2954
        %v2964 = vadd.f32 %v2946, %v2955
        %v2965 = vadd.f32 %v2947, %v2956
        %v2966 = vadd.f32 %v2948, %v2957
        %v2967 = vadd.f32 %v2949, %v2958
        %v2968 = vadd.f32 %v2950, %v2959
        %v2969 = vadd.f32 %v2951, %v2960
        %v2970 = vadd.f32 %v2952, %v2961
        %2971 = vst [vmem:[%s375] sm:$0xff] %v2962
        %2972 = vst [vmem:[%s375 + $0x8] sm:$0xff] %v2963
        %2973 = vst [vmem:[%s375 + $0x10] sm:$0xff] %v2964
        %2974 = vst [vmem:[%s375 + $0x18] sm:$0xff] %v2965
        %2975 = vst [vmem:[%s375 + $0x20] sm:$0xff] %v2966
        %2976 = vst [vmem:[%s375 + $0x28] sm:$0xff] %v2967
        %2977 = vst [vmem:[%s375 + $0x30] sm:$0xff] %v2968
        %2978 = vst [vmem:[%s375 + $0x38] sm:$0xff] %v2969
        %2979 = vst [vmem:[%s375 + $0x40] sm:$0x1] %v2970
        %p2980 = scmp.lt.s32.totalorder %s19, 1
        %s2981 = scalar_select %p2980, %s19, 1
        %p2982 = scmp.lt.s32.totalorder %s20, 0
        %s2983 = scalar_select %p2982, %s20, 0
        %s2984 = smul.addr %s2981, 9
        %s2985 = sadd.s32 %s2983, %s2984
        %s2986 = smul.addr %s2985, 8
        %s2987 = scalar_lea.vmem %s4, %s2986
        // Predicated region
        $region113: #{tpu_custom_call.1} parent=103 // pred_check
          %p2988 = pneg %p147
        $region114: #{tpu_custom_call.1} parent=103 // pred_check_branch
          %2990 = sbr.rel (%p2988) target = $region116
        $region115: #{tpu_custom_call.1} parent=103 // pred_region
          _
        $region116: #{tpu_custom_call.1} parent=103 // pred_fallthru
          _
      $region104: #{tpu_custom_call.1} parent=5 // pred_fallthru
        _
      %p2991 = scmp.le.s32.totalorder 2, %s10
      // Predicated region
      $region117: #{tpu_custom_call.1} parent=5 // pred_check
        %p2992 = pneg %p2991
      $region118: #{tpu_custom_call.1} parent=5 // pred_check_branch
        %2994 = sbr.rel (%p2992) target = $region120
      $region119: #{tpu_custom_call.1} parent=5 // pred_region
        %s2995 = ssub.s32 %s10, 2
        // Predicated region
        $region121: #{tpu_custom_call.1} parent=119 // pred_check
          %p2996 = pneg %p153
        $region122: #{tpu_custom_call.1} parent=119 // pred_check_branch
          %2998 = sbr.rel (%p2996) target = $region124
        $region123: #{tpu_custom_call.1} parent=119 // pred_region
          %p2999 = scmp.lt.s32.totalorder %s21, 1
          %s3000 = scalar_select %p2999, %s21, 1
          %p3001 = scmp.lt.s32.totalorder %s22, 0
          %s3002 = scalar_select %p3001, %s22, 0
          %s3003 = smul.addr %s3000, 9
          %s3004 = sadd.s32 %s3002, %s3003
          %s3005 = smul.addr %s3004, 8
          %s3006 = scalar_lea.vmem %s4, %s3005
        $region124: #{tpu_custom_call.1} parent=119 // pred_fallthru
          _
      $region120: #{tpu_custom_call.1} parent=5 // pred_fallthru
        _
    $region6: #{tpu_custom_call.1} parent=1 // loop_footer
      %s14 = sadd.s32 1, %s10
    $region7: #{tpu_custom_call.1} parent=1 // loop_footer_branch
      %9 = sbr.rel target = $region3
    $region8: #{tpu_custom_call.1} parent=1 // loop_exit
      _

</llo_original>
